<compile_context>
chip_gen: v6e
topology: v6e:2x2x1
jax: 0.10.0
libtpu: 0.0.40
codegen_flags: <defaults>
</compile_context>

<pallas_src>
import functools

import jax
import jax.numpy as jnp
from jax.experimental import pallas as pl
from jax.experimental.pallas import tpu as pltpu

LANE = 128
NEG_SLOPE = 0.2


def _round_up(x, m):
    return ((x + m - 1) // m) * m


def _full_spec(shape):
    # Whole-array block resident in VMEM (no grid).
    return pl.BlockSpec(shape, lambda: (0,) * len(shape))


# ----------------------------------------------------------------------------
# Path 1: fully VMEM-resident fused kernel (small graphs)
# ----------------------------------------------------------------------------
def _gcn_resident_kernel(*refs, layer_cfg, negative_slope):
    """refs = (a_ref, x_ref, w0, b0, w1, b1, ..., o_ref)."""
    a_ref, x_ref = refs[0], refs[1]
    o_ref = refs[-1]
    wb = refs[2:-1]

    a = a_ref[...]          # bf16, reused by every layer's aggregation matmul
    h = x_ref[...]          # bf16 activations (never leave VMEM/vregs)
    out = None

    for l, (apply_act, hw_first) in enumerate(layer_cfg):
        w = wb[2 * l][...]        # bf16 [Cip, Cop]
        b = wb[2 * l + 1][...]    # f32  [1,  Cop]
        if hw_first:
            # padded cout < padded cin: transform first so the O(N^2)
            # aggregation runs on the narrower channel count.
            hw = jnp.dot(h, w, preferred_element_type=jnp.float32)
            out = jnp.dot(a, hw.astype(jnp.bfloat16),
                          preferred_element_type=jnp.float32) + b
        else:
            ah = jnp.dot(a, h, preferred_element_type=jnp.float32)
            out = jnp.dot(ah.astype(jnp.bfloat16), w,
                          preferred_element_type=jnp.float32) + b
        if apply_act:  # LeakyReLU via a single max (slope in (0,1))
            out = jnp.maximum(out, negative_slope * out)
        h = out.astype(jnp.bfloat16)

    # F.normalize(h, p=2, dim=1, eps=1e-12): rsqrt on the EUP slot; padded
    # lanes are exactly zero so they do not perturb the row norms.
    sumsq = jnp.sum(out * out, axis=1, keepdims=True)
    inv_norm = jax.lax.rsqrt(jnp.maximum(sumsq, 1e-24))   # == 1/max(||h||,1e-12)
    o_ref[...] = (out * inv_norm).astype(o_ref.dtype)


def _gcn_forward_resident(a_hat, x, params, negative_slope):
    n = a_hat.shape[0]
    in_c = x.shape[1]
    c0p = _round_up(in_c, LANE)
    x_p = jnp.pad(x, ((0, 0), (0, c0p - in_c))).astype(jnp.bfloat16)
    a_bf16 = a_hat.astype(jnp.bfloat16)

    flat_wb, in_specs, layer_cfg = [], [_full_spec((n, n)), _full_spec((n, c0p))], []
    cin = in_c
    flops = 0
    bytes_accessed = 2 * n * n + 2 * n * c0p
    cmax_p = c0p
    for w, b, apply_act in params:
        cin_w, cout = w.shape
        assert cin_w == cin
        cin_p, cout_p = _round_up(cin, LANE), _round_up(cout, LANE)
        cmax_p = max(cmax_p, cout_p)
        w_p = jnp.pad(w, ((0, cin_p - cin), (0, cout_p - cout))).astype(jnp.bfloat16)
        b_p = jnp.pad(b.reshape(1, cout),
                      ((0, 0), (0, cout_p - cout))).astype(jnp.float32)
        flat_wb += [w_p, b_p]
        in_specs += [_full_spec((cin_p, cout_p)), _full_spec((1, cout_p))]
        hw_first = cout_p < cin_p                       # padded (MXU-visible) dims
        layer_cfg.append((apply_act, hw_first))
        agg_c = cout_p if hw_first else cin_p
        flops += 2 * n * n * agg_c + 2 * n * cin_p * cout_p
        bytes_accessed += 2 * cin_p * cout_p + 4 * cout_p
        cin = cout
    out_c = cin
    out_cp = _round_up(out_c, LANE)
    bytes_accessed += 4 * n * out_cp

    kernel = functools.partial(_gcn_resident_kernel, layer_cfg=tuple(layer_cfg),
                               negative_slope=negative_slope)

    # VMEM limit from actual padded footprint + f32-intermediate headroom.
    vmem_bytes = int(bytes_accessed + 4 * 4 * n * cmax_p + (16 << 20))

    out_padded = pl.pallas_call(
        kernel,
        out_shape=jax.ShapeDtypeStruct((n, out_cp), jnp.float32),
        in_specs=in_specs,
        out_specs=_full_spec((n, out_cp)),
        compiler_params=pltpu.CompilerParams(
            vmem_limit_bytes=min(vmem_bytes, 100 * 1024 * 1024)),
        cost_estimate=pl.CostEstimate(flops=int(flops), transcendentals=int(n),
                                      bytes_accessed=int(bytes_accessed)),
    )(a_bf16, x_p, *flat_wb)
    return out_padded[:, :out_c]


# ----------------------------------------------------------------------------
# Path 2: tiled kernel — A_hat streamed, H / W / b resident in VMEM scratch
# ----------------------------------------------------------------------------
def _gcn_tiled_kernel(a_ref, x_ref, w_ref, b_ref, o_ref, hin, hout, acc,
                      *, n_layers, tm, tk, negative_slope):
    """grid = (layer L, row tile i, reduction tile k) — all 'arbitrary'.

      a_ref : [tm, tk]         bf16  streamed A_hat tile (double-buffered DMA)
      x_ref : [Np, Cmax]       bf16  padded input features (resident)
      w_ref : [1, Cmax, Cmax]  bf16  current layer's padded weight (resident/layer)
      b_ref : [1, 1, Cmax]     f32   current layer's padded bias
      o_ref : [tm, Cmax]       f32   output row tile (written at the last layer)
      hin/hout : [Np, Cmax]    bf16  resident activations (ping / pong)
      acc   : [tm, Cmax]       f32   aggregation accumulator for this row tile
    """
    l = pl.program_id(0)
    i = pl.program_id(1)
    k = pl.program_id(2)
    nk = pl.num_programs(2)

    # New layer: refresh the resident input activations H_in.
    @pl.when(jnp.logical_and(i == 0, k == 0))
    def _():
        @pl.when(l == 0)
        def _():
            pltpu.sync_copy(x_ref, hin)

        @pl.when(l > 0)
        def _():
            pltpu.sync_copy(hout, hin)

    # Zero the accumulator at the start of the k reduction.
    @pl.when(k == 0)
    def _():
        acc[...] = jnp.zeros_like(acc)

    # Aggregation (aggregate-first: no recompute of the transform per row tile):
    #   acc[i] += A[i, k] @ H_in[k]
    k_off = pl.multiple_of(k * tk, tk)
    h_k = hin[pl.ds(k_off, tk), :]
    acc[...] += jnp.dot(a_ref[...], h_k, preferred_element_type=jnp.float32)

    # End of the k reduction: transform, bias, activation / final normalize.
    @pl.when(k == nk - 1)
    def _():
        out = jnp.dot(acc[...].astype(jnp.bfloat16), w_ref[0],
                      preferred_element_type=jnp.float32) + b_ref[0]

        @pl.when(l < n_layers - 1)          # hidden layer: LeakyReLU, keep on-chip
        def _():
            h_act = jnp.maximum(out, negative_slope * out)
            i_off = pl.multiple_of(i * tm, tm)
            hout[pl.ds(i_off, tm), :] = h_act.astype(jnp.bfloat16)

        @pl.when(l == n_layers - 1)         # last layer: L2 normalize and store
        def _():
            sumsq = jnp.sum(out * out, axis=1, keepdims=True)
            inv_norm = jax.lax.rsqrt(jnp.maximum(sumsq, 1e-24))
            o_ref[...] = (out * inv_norm).astype(o_ref.dtype)


def _gcn_forward_tiled(a_hat, x, params, negative_slope, tile=None):
    n = a_hat.shape[0]
    in_c = x.shape[1]
    dims = [in_c] + [w.shape[1] for (w, _, _) in params]
    cmax = _round_up(max(dims), LANE)
    n_layers = len(params)

    # Large A tiles hit HBM roofline (tiling sweep: 512 >> 128/256); default
    # double buffering (Buffered(2)) on the streamed A BlockSpec.
    if tile is None:
        tile = 512
    tile = min(tile, _round_up(n, LANE))
    np_ = _round_up(n, tile)
    tm = tk = tile
    gi, gk = np_ // tm, np_ // tk

    # Zero row/col padding of A_hat and zero row padding of x keep the real
    # rows' results exact; padded rows are sliced off at the end.
    a_p = jnp.pad(a_hat, ((0, np_ - n), (0, np_ - n))).astype(jnp.bfloat16)
    x_p = jnp.pad(x, ((0, np_ - n), (0, cmax - in_c))).astype(jnp.bfloat16)

    w_stack, b_stack = [], []
    for w, b, _ in params:
        cin, cout = w.shape
        w_stack.append(jnp.pad(w, ((0, cmax - cin), (0, cmax - cout))).astype(jnp.bfloat16))
        b_stack.append(jnp.pad(b.reshape(1, cout), ((0, 0), (0, cmax - cout))).astype(jnp.float32))
    w_all = jnp.stack(w_stack)            # [L, Cmax, Cmax]
    b_all = jnp.stack(b_stack)            # [L, 1, Cmax]

    kernel = functools.partial(_gcn_tiled_kernel, n_layers=n_layers,
                               tm=tm, tk=tk, negative_slope=negative_slope)

    flops = n_layers * (2 * np_ * np_ * cmax + 2 * np_ * cmax * cmax)
    bytes_accessed = (n_layers * 2 * np_ * np_ + 2 * np_ * cmax
                      + n_layers * (2 * cmax * cmax + 4 * cmax) + 4 * np_ * cmax)
    cost = pl.CostEstimate(flops=int(flops), transcendentals=int(np_),
                           bytes_accessed=int(bytes_accessed))

    # Resident footprint: hin + hout + x + acc + double-buffered A/W/b/out.
    vmem_bytes = int(2 * 2 * np_ * cmax + 2 * np_ * cmax + 4 * tm * cmax
                     + 2 * 2 * tm * tk + 2 * (2 * cmax * cmax + 4 * cmax)
                     + 2 * 4 * tm * cmax + (16 << 20))

    out_padded = pl.pallas_call(
        kernel,
        out_shape=jax.ShapeDtypeStruct((np_, cmax), jnp.float32),
        grid_spec=pltpu.PrefetchScalarGridSpec(
            num_scalar_prefetch=0,
            grid=(n_layers, gi, gk),
            in_specs=[
                pl.BlockSpec((tm, tk), lambda l, i, k: (i, k)),            # A tile
                pl.BlockSpec((np_, cmax), lambda l, i, k: (0, 0)),         # x (resident)
                pl.BlockSpec((1, cmax, cmax), lambda l, i, k: (l, 0, 0)),  # W_l
                pl.BlockSpec((1, 1, cmax), lambda l, i, k: (l, 0, 0)),     # b_l
            ],
            out_specs=pl.BlockSpec((tm, cmax), lambda l, i, k: (i, 0)),
            scratch_shapes=[
                pltpu.VMEM((np_, cmax), jnp.bfloat16),   # hin
                pltpu.VMEM((np_, cmax), jnp.bfloat16),   # hout
                pltpu.VMEM((tm, cmax), jnp.float32),     # acc
            ]),
        compiler_params=pltpu.CompilerParams(
            # Layers and the K reduction are sequential; the row axis cannot be
            # "parallel" here because layer l+1 reads every row tile of layer l
            # from the (per-core) VMEM scratch.
            dimension_semantics=("arbitrary", "arbitrary", "arbitrary"),
            vmem_limit_bytes=min(vmem_bytes, 56 * 1024 * 1024)),
        cost_estimate=cost,
    )(a_p, x_p, w_all, b_all)

    out_c = dims[-1]
    return out_padded[:n, :out_c]


# ----------------------------------------------------------------------------
# Wrapper: pick resident vs. tiled from a computed VMEM budget
# ----------------------------------------------------------------------------
def gcn_forward(a_hat, x, params, negative_slope=NEG_SLOPE,
                vmem_budget_bytes=40 * 1024 * 1024, force_tiled=False, tile=None):
    """params: list of (W [cin,cout] f32, b [cout] f32, apply_act bool).
    Returns [N, out_channels] f32 == F.normalize(GraphConv stack(x)).

    vmem_budget_bytes defaults to a value safe on v7x (64 MiB physical VMEM);
    on v5e/v6e (128 MiB) a larger budget keeps bigger graphs on the resident path.
    """
    n = a_hat.shape[0]
    dims_p = [_round_up(x.shape[1], LANE)] + \
             [_round_up(w.shape[1], LANE) for (w, _, _) in params]
    cmax_p = max(dims_p)
    resident_bytes = (2 * n * n + 2 * n * dims_p[0]
                      + sum(2 * a * b_ + 4 * b_ for a, b_ in zip(dims_p[:-1], dims_p[1:]))
                      + 4 * n * dims_p[-1] + 4 * 4 * n * cmax_p)
    if force_tiled or resident_bytes > vmem_budget_bytes:
        return _gcn_forward_tiled(a_hat, x, params, negative_slope, tile=tile)
    return _gcn_forward_resident(a_hat, x, params, negative_slope)


# ----------------------------------------------------------------------------
# Pure-JAX reference, parameter / graph construction (deterministic, in-script)
# ----------------------------------------------------------------------------
def gcn_reference(a_hat, x, params, negative_slope=NEG_SLOPE):
    h = x
    for w, b, apply_act in params:
        h = a_hat @ (h @ w) + b
        if apply_act:
            h = jnp.where(h > 0, h, negative_slope * h)
    norm = jnp.sqrt(jnp.sum(h * h, axis=1, keepdims=True))
    return h / jnp.maximum(norm, 1e-12)


def xavier_uniform(key, shape):
    fan_in, fan_out = shape
    limit = jnp.sqrt(6.0 / (fan_in + fan_out))
    return jax.random.uniform(key, shape, jnp.float32, -limit, limit)


def build_gcn_params(key, in_channels, out_channels, hidden_layers):
    dims = [in_channels] + list(hidden_layers) + [out_channels]
    params = []
    for i in range(len(dims) - 1):
        key, wk, bk = jax.random.split(key, 3)
        w = xavier_uniform(wk, (dims[i], dims[i + 1]))
        b = 0.1 * jax.random.normal(bk, (dims[i + 1],), jnp.float32)
        apply_act = i < len(dims) - 2          # LeakyReLU(0.2) on hidden layers only
        params.append((w, b, apply_act))
    return params


def build_normalized_adjacency(key, n):
    a = (jax.random.uniform(key, (n, n)) < 0.3).astype(jnp.float32)
    a = jnp.maximum(a, a.T)
    a = jnp.maximum(a, jnp.eye(n, dtype=jnp.float32))   # self loops -> no zero degree
    deg = jnp.sum(a, axis=1)
    d_inv_sqrt = 1.0 / jnp.sqrt(deg)
    return a * d_inv_sqrt[:, None] * d_inv_sqrt[None, :]


# ----------------------------------------------------------------------------
if __name__ == "__main__":
    key = jax.random.PRNGKey(0)
    k_graph, k_feat, k_param = jax.random.split(key, 3)

    # Small shapes consistent with the module (hidden_layers scaled down).
    num_nodes = 256
    in_channels = 8
    hidden = [32, 32]
    out_channels = 16

    a_hat = build_normalized_adjacency(k_graph, num_nodes)
    x = jax.random.normal(k_feat, (num_nodes, in_channels), jnp.float32)
    params = build_gcn_params(k_param, in_channels, out_channels, hidden)

    ref = gcn_reference(a_hat, x, params)

    # Path 1: small graph -> fully VMEM-resident fused kernel.
    out_res = jax.block_until_ready(gcn_forward(a_hat, x, params))
    # Path 2: same graph forced through the tiled/streamed-A kernel
    # (grid = (layers, row tiles, K tiles)) to validate the large-N path.
    out_tiled = jax.block_until_ready(
        gcn_forward(a_hat, x, params, force_tiled=True, tile=128))

    for out in (out_res, out_tiled):
        assert out.shape == (num_nodes, out_channels)
        assert bool(jnp.all(jnp.isfinite(out)))
        assert float(jnp.max(jnp.abs(out - ref))) < 8e-2   # bf16 MXU tolerance
    print("KERNEL_OK")
</pallas_src>

<mosaic_0001>
module attributes {stable_mosaic.version = 11 : i64} {
  func.func @_gcn_resident_kernel(%arg0: memref<256x256xbf16, #tpu.memory_space<vmem>>, %arg1: memref<256x128xbf16, #tpu.memory_space<vmem>>, %arg2: memref<128x128xbf16, #tpu.memory_space<vmem>>, %arg3: memref<1x128xf32, #tpu.memory_space<vmem>>, %arg4: memref<128x128xbf16, #tpu.memory_space<vmem>>, %arg5: memref<1x128xf32, #tpu.memory_space<vmem>>, %arg6: memref<128x128xbf16, #tpu.memory_space<vmem>>, %arg7: memref<1x128xf32, #tpu.memory_space<vmem>>, %arg8: memref<256x128xf32, #tpu.memory_space<vmem>>) attributes {dimension_semantics = [], scalar_prefetch = 0 : i64, scratch_operands = 0 : i64, tpu.core_type = #tpu.core_type<tc>} {
    %c0 = arith.constant 0 : index
    %c0_0 = arith.constant 0 : index
    %0 = vector.load %arg0[%c0, %c0_0] : memref<256x256xbf16, #tpu.memory_space<vmem>>, vector<256x256xbf16>
    %c0_1 = arith.constant 0 : index
    %c0_2 = arith.constant 0 : index
    %1 = vector.load %arg1[%c0_1, %c0_2] : memref<256x128xbf16, #tpu.memory_space<vmem>>, vector<256x128xbf16>
    %c0_3 = arith.constant 0 : index
    %c0_4 = arith.constant 0 : index
    %2 = vector.load %arg2[%c0_3, %c0_4] : memref<128x128xbf16, #tpu.memory_space<vmem>>, vector<128x128xbf16>
    %c0_5 = arith.constant 0 : index
    %c0_6 = arith.constant 0 : index
    %3 = vector.load %arg3[%c0_5, %c0_6] : memref<1x128xf32, #tpu.memory_space<vmem>>, vector<1x128xf32>
    %cst = arith.constant dense<0.000000e+00> : vector<256x128xf32>
    %4 = tpu.matmul %0, %1, %cst {dimension_numbers = #tpu.dot_dimension_numbers<[1], [0], [0], [1], [0, 0, 1, 1], [], []>} : vector<256x256xbf16>, vector<256x128xbf16>, vector<256x128xf32> -> vector<256x128xf32>
    %5 = arith.truncf %4 : vector<256x128xf32> to vector<256x128xbf16>
    %cst_7 = arith.constant dense<0.000000e+00> : vector<256x128xf32>
    %6 = tpu.matmul %5, %2, %cst_7 {dimension_numbers = #tpu.dot_dimension_numbers<[1], [0], [0], [1], [0, 0, 1, 1], [], []>} : vector<256x128xbf16>, vector<128x128xbf16>, vector<256x128xf32> -> vector<256x128xf32>
    %7 = vector.broadcast %3 : vector<1x128xf32> to vector<256x128xf32>
    %8 = arith.addf %6, %7 : vector<256x128xf32>
    %cst_8 = arith.constant 2.000000e-01 : f32
    %9 = vector.broadcast %cst_8 : f32 to vector<256x128xf32>
    %10 = arith.mulf %9, %8 : vector<256x128xf32>
    %11 = arith.maximumf %8, %10 : vector<256x128xf32>
    %12 = arith.truncf %11 : vector<256x128xf32> to vector<256x128xbf16>
    %c0_9 = arith.constant 0 : index
    %c0_10 = arith.constant 0 : index
    %13 = vector.load %arg4[%c0_9, %c0_10] : memref<128x128xbf16, #tpu.memory_space<vmem>>, vector<128x128xbf16>
    %c0_11 = arith.constant 0 : index
    %c0_12 = arith.constant 0 : index
    %14 = vector.load %arg5[%c0_11, %c0_12] : memref<1x128xf32, #tpu.memory_space<vmem>>, vector<1x128xf32>
    %cst_13 = arith.constant dense<0.000000e+00> : vector<256x128xf32>
    %15 = tpu.matmul %0, %12, %cst_13 {dimension_numbers = #tpu.dot_dimension_numbers<[1], [0], [0], [1], [0, 0, 1, 1], [], []>} : vector<256x256xbf16>, vector<256x128xbf16>, vector<256x128xf32> -> vector<256x128xf32>
    %16 = arith.truncf %15 : vector<256x128xf32> to vector<256x128xbf16>
    %cst_14 = arith.constant dense<0.000000e+00> : vector<256x128xf32>
    %17 = tpu.matmul %16, %13, %cst_14 {dimension_numbers = #tpu.dot_dimension_numbers<[1], [0], [0], [1], [0, 0, 1, 1], [], []>} : vector<256x128xbf16>, vector<128x128xbf16>, vector<256x128xf32> -> vector<256x128xf32>
    %18 = vector.broadcast %14 : vector<1x128xf32> to vector<256x128xf32>
    %19 = arith.addf %17, %18 : vector<256x128xf32>
    %cst_15 = arith.constant 2.000000e-01 : f32
    %20 = vector.broadcast %cst_15 : f32 to vector<256x128xf32>
    %21 = arith.mulf %20, %19 : vector<256x128xf32>
    %22 = arith.maximumf %19, %21 : vector<256x128xf32>
    %23 = arith.truncf %22 : vector<256x128xf32> to vector<256x128xbf16>
    %c0_16 = arith.constant 0 : index
    %c0_17 = arith.constant 0 : index
    %24 = vector.load %arg6[%c0_16, %c0_17] : memref<128x128xbf16, #tpu.memory_space<vmem>>, vector<128x128xbf16>
    %c0_18 = arith.constant 0 : index
    %c0_19 = arith.constant 0 : index
    %25 = vector.load %arg7[%c0_18, %c0_19] : memref<1x128xf32, #tpu.memory_space<vmem>>, vector<1x128xf32>
    %cst_20 = arith.constant dense<0.000000e+00> : vector<256x128xf32>
    %26 = tpu.matmul %0, %23, %cst_20 {dimension_numbers = #tpu.dot_dimension_numbers<[1], [0], [0], [1], [0, 0, 1, 1], [], []>} : vector<256x256xbf16>, vector<256x128xbf16>, vector<256x128xf32> -> vector<256x128xf32>
    %27 = arith.truncf %26 : vector<256x128xf32> to vector<256x128xbf16>
    %cst_21 = arith.constant dense<0.000000e+00> : vector<256x128xf32>
    %28 = tpu.matmul %27, %24, %cst_21 {dimension_numbers = #tpu.dot_dimension_numbers<[1], [0], [0], [1], [0, 0, 1, 1], [], []>} : vector<256x128xbf16>, vector<128x128xbf16>, vector<256x128xf32> -> vector<256x128xf32>
    %29 = vector.broadcast %25 : vector<1x128xf32> to vector<256x128xf32>
    %30 = arith.addf %28, %29 : vector<256x128xf32>
    %31 = arith.mulf %30, %30 : vector<256x128xf32>
    %cst_22 = arith.constant dense<0.000000e+00> : vector<256xf32>
    %32 = vector.multi_reduction <add>, %31, %cst_22 [1] : vector<256x128xf32> to vector<256xf32>
    %33 = vector.shape_cast %32 : vector<256xf32> to vector<256x1xf32>
    %cst_23 = arith.constant 1.000000e-24 : f32
    %34 = vector.broadcast %cst_23 : f32 to vector<256x1xf32>
    %35 = arith.maximumf %33, %34 : vector<256x1xf32>
    %36 = math.rsqrt %35 : vector<256x1xf32>
    %37 = vector.broadcast %36 : vector<256x1xf32> to vector<256x128xf32>
    %38 = arith.mulf %30, %37 : vector<256x128xf32>
    %c0_24 = arith.constant 0 : index
    %c0_25 = arith.constant 0 : index
    %39 = vector.load %arg8[%c0_24, %c0_25] : memref<256x128xf32, #tpu.memory_space<vmem>>, vector<256x128xf32>
    tpu.vector_store %arg8[%c0_24, %c0_25], %38 {strides = array<i32>} : memref<256x128xf32, #tpu.memory_space<vmem>>, vector<256x128xf32>,
    return
  }
}

</mosaic_0001>

<llo_original>
// kernel: tpu_custom_call.1
$region0: #{tpu_custom_call.1}
  #allocation0 [shape = 'u32[]', space=smem, size = 0x4, offset = 0x4, fixed_abs, tag = 'smem constant byte address 0x4 - core index']
  #allocation1 [shape = 'u32[144,128]{1,0:T(1,128)}', space=vmem, size = 0x12000, scoped, tag = 'internal scratch']
  %s0 = inlined_call_operand.hbm [shape: bf16[256,256], index: 0, kind: input, shape index: {}]
  %s1 = inlined_call_operand.hbm [shape: bf16[256,128], index: 1, kind: input, shape index: {}]
  %s2 = inlined_call_operand.hbm [shape: bf16[128,128], index: 2, kind: input, shape index: {}]
  %s3 = inlined_call_operand.vmem [shape: f32[1,128], index: 3, kind: input, shape index: {}]
  %s4 = inlined_call_operand.hbm [shape: bf16[128,128], index: 4, kind: input, shape index: {}]
  %s5 = inlined_call_operand.vmem [shape: f32[1,128], index: 5, kind: input, shape index: {}]
  %s6 = inlined_call_operand.hbm [shape: bf16[128,128], index: 6, kind: input, shape index: {}]
  %s7 = inlined_call_operand.vmem [shape: f32[1,128], index: 7, kind: input, shape index: {}]
  %s8 = inlined_call_operand.hbm [shape: f32[256,128], index: 8, kind: output, shape index: {}]
  %s9 = sld [smem:[#allocation0]]
  $region62: #{tpu_custom_call.1} parent=0
    _
  %s11 = ssub.s32 1, %s9
  %s12 = scalar_select 0, %s11, %s9
  $region1: #{tpu_custom_call.1} parent=0
    #allocation2 [shape = 'u8[131072]{0}', space=vmem, size = 0x20000, scoped, tag = 'input window, operand 0, single buffered']
    #allocation3 [shape = 's32[1]{0}', space=sflag, size = 0x4, scoped, tag = 'scoped memory for tpu_custom_call.1']
    #allocation4 [shape = 's32[1]{0}', space=sflag, size = 0x4, scoped, tag = 'scoped memory for tpu_custom_call.1']
    #allocation5 [shape = 'u8[65536]{0}', space=vmem, size = 0x10000, scoped, tag = 'input window, operand 1, single buffered']
    #allocation6 [shape = 's32[1]{0}', space=sflag, size = 0x4, scoped, tag = 'scoped memory for tpu_custom_call.1']
    #allocation7 [shape = 'u8[32768]{0}', space=vmem, size = 0x8000, scoped, tag = 'input window, operand 2, single buffered']
    #allocation8 [shape = 'u8[32768]{0}', space=vmem, size = 0x8000, scoped, tag = 'input window, operand 4, single buffered']
    #allocation9 [shape = 's32[1]{0}', space=sflag, size = 0x4, scoped, tag = 'scoped memory for tpu_custom_call.1']
    #allocation10 [shape = 'u8[32768]{0}', space=vmem, size = 0x8000, scoped, tag = 'input window, operand 6, single buffered']
    #allocation11 [shape = 'u8[131072]{0}', space=vmem, size = 0x20000, scoped, tag = 'output window, operand 0, single buffered']
    %13 = vsyncpa [#allocation3], 0
    %14 = vsyncpa [#allocation6], 0
    %15 = vsyncpa [#allocation9], 0
    %16 = vsyncpa [#allocation4], 0
    // Predicated region
    $region2: #{tpu_custom_call.1} parent=1 // pred_check
      _
    $region3: #{tpu_custom_call.1} parent=1 // pred_check_branch
      %18 = sbr.rel (0) target = $region5
    $region4: #{tpu_custom_call.1} parent=1 // pred_region
      %s20 = ssub.s32 4096, 4096
      %21 = vsyncadd [#allocation3], %s20
      %s22 = sshll.u32 [#allocation2], 4
      %s23 = int_to_ptr.vmem [resolvable:$true] %s22
      %28 = dma.hbm_to_vmem [thread:$0]  %s0, 4096, %s23, [#allocation3], 128, 128, 8
    $region5: #{tpu_custom_call.1} parent=1 // pred_fallthru
      _
    // Predicated region
    $region6: #{tpu_custom_call.1} parent=1 // pred_check
      _
    $region7: #{tpu_custom_call.1} parent=1 // pred_check_branch
      %30 = sbr.rel (0) target = $region9
    $region8: #{tpu_custom_call.1} parent=1 // pred_region
      %s32 = ssub.s32 2048, 2048
      %33 = vsyncadd [#allocation6], %s32
      %s34 = sshll.u32 [#allocation5], 4
      %s35 = int_to_ptr.vmem [resolvable:$true] %s34
      %40 = dma.hbm_to_vmem [thread:$0]  %s1, 2048, %s35, [#allocation6], 64, 64, 4
    $region9: #{tpu_custom_call.1} parent=1 // pred_fallthru
      _
    // Predicated region
    $region10: #{tpu_custom_call.1} parent=1 // pred_check
      _
    $region11: #{tpu_custom_call.1} parent=1 // pred_check_branch
      %42 = sbr.rel (0) target = $region13
    $region12: #{tpu_custom_call.1} parent=1 // pred_region
      %s44 = ssub.s32 1024, 1024
      %45 = vsyncadd [#allocation6], %s44
      %s46 = sshll.u32 [#allocation7], 4
      %s47 = int_to_ptr.vmem [resolvable:$true] %s46
      %52 = dma.hbm_to_vmem [thread:$0]  %s2, 1024, %s47, [#allocation6], 64, 64, 4
    $region13: #{tpu_custom_call.1} parent=1 // pred_fallthru
      _
    // Predicated region
    $region14: #{tpu_custom_call.1} parent=1 // pred_check
      _
    $region15: #{tpu_custom_call.1} parent=1 // pred_check_branch
      %54 = sbr.rel (0) target = $region17
    $region16: #{tpu_custom_call.1} parent=1 // pred_region
      _
    $region17: #{tpu_custom_call.1} parent=1 // pred_fallthru
      _
    // Predicated region
    $region18: #{tpu_custom_call.1} parent=1 // pred_check
      _
    $region19: #{tpu_custom_call.1} parent=1 // pred_check_branch
      %56 = sbr.rel (0) target = $region21
    $region20: #{tpu_custom_call.1} parent=1 // pred_region
      %s58 = ssub.s32 1024, 1024
      %59 = vsyncadd [#allocation9], %s58
      %s60 = sshll.u32 [#allocation8], 4
      %s61 = int_to_ptr.vmem [resolvable:$true] %s60
      %66 = dma.hbm_to_vmem [thread:$0]  %s4, 1024, %s61, [#allocation9], 64, 64, 4
    $region21: #{tpu_custom_call.1} parent=1 // pred_fallthru
      _
    // Predicated region
    $region22: #{tpu_custom_call.1} parent=1 // pred_check
      _
    $region23: #{tpu_custom_call.1} parent=1 // pred_check_branch
      %68 = sbr.rel (0) target = $region25
    $region24: #{tpu_custom_call.1} parent=1 // pred_region
      _
    $region25: #{tpu_custom_call.1} parent=1 // pred_fallthru
      _
    // Predicated region
    $region26: #{tpu_custom_call.1} parent=1 // pred_check
      _
    $region27: #{tpu_custom_call.1} parent=1 // pred_check_branch
      %70 = sbr.rel (0) target = $region29
    $region28: #{tpu_custom_call.1} parent=1 // pred_region
      %s72 = ssub.s32 1024, 1024
      %73 = vsyncadd [#allocation9], %s72
      %s74 = sshll.u32 [#allocation10], 4
      %s75 = int_to_ptr.vmem [resolvable:$true] %s74
      %80 = dma.hbm_to_vmem [thread:$0]  %s6, 1024, %s75, [#allocation9], 64, 64, 4
    $region29: #{tpu_custom_call.1} parent=1 // pred_fallthru
      _
    // Predicated region
    $region30: #{tpu_custom_call.1} parent=1 // pred_check
      _
    $region31: #{tpu_custom_call.1} parent=1 // pred_check_branch
      %82 = sbr.rel (0) target = $region33
    $region32: #{tpu_custom_call.1} parent=1 // pred_region
      _
    $region33: #{tpu_custom_call.1} parent=1 // pred_fallthru
      _
    // Predicated region
    $region34: #{tpu_custom_call.1} parent=1 // pred_check
      _
    $region35: #{tpu_custom_call.1} parent=1 // pred_check_branch
      %84 = sbr.rel (0) target = $region37
    $region36: #{tpu_custom_call.1} parent=1 // pred_region
      %85 = dma.done [#allocation3], 4096
    $region37: #{tpu_custom_call.1} parent=1 // pred_fallthru
      _
    // Predicated region
    $region38: #{tpu_custom_call.1} parent=1 // pred_check
      _
    $region39: #{tpu_custom_call.1} parent=1 // pred_check_branch
      %87 = sbr.rel (0) target = $region41
    $region40: #{tpu_custom_call.1} parent=1 // pred_region
      %88 = dma.done [#allocation6], 2048
    $region41: #{tpu_custom_call.1} parent=1 // pred_fallthru
      _
    // Predicated region
    $region42: #{tpu_custom_call.1} parent=1 // pred_check
      _
    $region43: #{tpu_custom_call.1} parent=1 // pred_check_branch
      %90 = sbr.rel (0) target = $region45
    $region44: #{tpu_custom_call.1} parent=1 // pred_region
      %91 = dma.done [#allocation6], 1024
    $region45: #{tpu_custom_call.1} parent=1 // pred_fallthru
      _
    // Predicated region
    $region46: #{tpu_custom_call.1} parent=1 // pred_check
      _
    $region47: #{tpu_custom_call.1} parent=1 // pred_check_branch
      %93 = sbr.rel (0) target = $region49
    $region48: #{tpu_custom_call.1} parent=1 // pred_region
      %94 = dma.done [#allocation9], 1024
    $region49: #{tpu_custom_call.1} parent=1 // pred_fallthru
      _
    // Predicated region
    $region50: #{tpu_custom_call.1} parent=1 // pred_check
      _
    $region51: #{tpu_custom_call.1} parent=1 // pred_check_branch
      %96 = sbr.rel (0) target = $region53
    $region52: #{tpu_custom_call.1} parent=1 // pred_region
      %97 = dma.done [#allocation9], 1024
    $region53: #{tpu_custom_call.1} parent=1 // pred_fallthru
      _
    %v99 = vld [vmem:[#allocation2] sm:$0xff]
    %v100 = vld [vmem:[#allocation2 + $0x8] sm:$0xff]
    %v101 = vld [vmem:[#allocation2 + $0x10] sm:$0xff]
    %v102 = vld [vmem:[#allocation2 + $0x18] sm:$0xff]
    %v103 = vld [vmem:[#allocation2 + $0x20] sm:$0xff]
    %v104 = vld [vmem:[#allocation2 + $0x28] sm:$0xff]
    %v105 = vld [vmem:[#allocation2 + $0x30] sm:$0xff]
    %v106 = vld [vmem:[#allocation2 + $0x38] sm:$0xff]
    %v107 = vld [vmem:[#allocation2 + $0x40] sm:$0xff]
    %v108 = vld [vmem:[#allocation2 + $0x48] sm:$0xff]
    %v109 = vld [vmem:[#allocation2 + $0x50] sm:$0xff]
    %v110 = vld [vmem:[#allocation2 + $0x58] sm:$0xff]
    %v111 = vld [vmem:[#allocation2 + $0x60] sm:$0xff]
    %v112 = vld [vmem:[#allocation2 + $0x68] sm:$0xff]
    %v113 = vld [vmem:[#allocation2 + $0x70] sm:$0xff]
    %v114 = vld [vmem:[#allocation2 + $0x78] sm:$0xff]
    %v115 = vld [vmem:[#allocation2 + $0x80] sm:$0xff]
    %v116 = vld [vmem:[#allocation2 + $0x88] sm:$0xff]
    %v117 = vld [vmem:[#allocation2 + $0x90] sm:$0xff]
    %v118 = vld [vmem:[#allocation2 + $0x98] sm:$0xff]
    %v119 = vld [vmem:[#allocation2 + $0xa0] sm:$0xff]
    %v120 = vld [vmem:[#allocation2 + $0xa8] sm:$0xff]
    %v121 = vld [vmem:[#allocation2 + $0xb0] sm:$0xff]
    %v122 = vld [vmem:[#allocation2 + $0xb8] sm:$0xff]
    %v123 = vld [vmem:[#allocation2 + $0xc0] sm:$0xff]
    %v124 = vld [vmem:[#allocation2 + $0xc8] sm:$0xff]
    %v125 = vld [vmem:[#allocation2 + $0xd0] sm:$0xff]
    %v126 = vld [vmem:[#allocation2 + $0xd8] sm:$0xff]
    %v127 = vld [vmem:[#allocation2 + $0xe0] sm:$0xff]
    %v128 = vld [vmem:[#allocation2 + $0xe8] sm:$0xff]
    %v129 = vld [vmem:[#allocation2 + $0xf0] sm:$0xff]
    %v130 = vld [vmem:[#allocation2 + $0xf8] sm:$0xff]
    %v131 = vld [vmem:[#allocation5] sm:$0xf]
    %v132 = vld [vmem:[#allocation5 + $0x4] sm:$0xf]
    %v133 = vld [vmem:[#allocation5 + $0x8] sm:$0xf]
    %v134 = vld [vmem:[#allocation5 + $0xc] sm:$0xf]
    %v135 = vld [vmem:[#allocation5 + $0x10] sm:$0xf]
    %v136 = vld [vmem:[#allocation5 + $0x14] sm:$0xf]
    %v137 = vld [vmem:[#allocation5 + $0x18] sm:$0xf]
    %v138 = vld [vmem:[#allocation5 + $0x1c] sm:$0xf]
    %v139 = vld [vmem:[#allocation5 + $0x20] sm:$0xf]
    %v140 = vld [vmem:[#allocation5 + $0x24] sm:$0xf]
    %v141 = vld [vmem:[#allocation5 + $0x28] sm:$0xf]
    %v142 = vld [vmem:[#allocation5 + $0x2c] sm:$0xf]
    %v143 = vld [vmem:[#allocation5 + $0x30] sm:$0xf]
    %v144 = vld [vmem:[#allocation5 + $0x34] sm:$0xf]
    %v145 = vld [vmem:[#allocation5 + $0x38] sm:$0xf]
    %v146 = vld [vmem:[#allocation5 + $0x3c] sm:$0xf]
    %v147 = vld [vmem:[#allocation5 + $0x40] sm:$0xf]
    %v148 = vld [vmem:[#allocation5 + $0x44] sm:$0xf]
    %v149 = vld [vmem:[#allocation5 + $0x48] sm:$0xf]
    %v150 = vld [vmem:[#allocation5 + $0x4c] sm:$0xf]
    %v151 = vld [vmem:[#allocation5 + $0x50] sm:$0xf]
    %v152 = vld [vmem:[#allocation5 + $0x54] sm:$0xf]
    %v153 = vld [vmem:[#allocation5 + $0x58] sm:$0xf]
    %v154 = vld [vmem:[#allocation5 + $0x5c] sm:$0xf]
    %v155 = vld [vmem:[#allocation5 + $0x60] sm:$0xf]
    %v156 = vld [vmem:[#allocation5 + $0x64] sm:$0xf]
    %v157 = vld [vmem:[#allocation5 + $0x68] sm:$0xf]
    %v158 = vld [vmem:[#allocation5 + $0x6c] sm:$0xf]
    %v159 = vld [vmem:[#allocation5 + $0x70] sm:$0xf]
    %v160 = vld [vmem:[#allocation5 + $0x74] sm:$0xf]
    %v161 = vld [vmem:[#allocation5 + $0x78] sm:$0xf]
    %v162 = vld [vmem:[#allocation5 + $0x7c] sm:$0xf]
    %v163 = vld [vmem:[#allocation7] sm:$0xf]
    %v164 = vld [vmem:[#allocation7 + $0x4] sm:$0xf]
    %v165 = vld [vmem:[#allocation7 + $0x8] sm:$0xf]
    %v166 = vld [vmem:[#allocation7 + $0xc] sm:$0xf]
    %v167 = vld [vmem:[#allocation7 + $0x10] sm:$0xf]
    %v168 = vld [vmem:[#allocation7 + $0x14] sm:$0xf]
    %v169 = vld [vmem:[#allocation7 + $0x18] sm:$0xf]
    %v170 = vld [vmem:[#allocation7 + $0x1c] sm:$0xf]
    %v171 = vld [vmem:[#allocation7 + $0x20] sm:$0xf]
    %v172 = vld [vmem:[#allocation7 + $0x24] sm:$0xf]
    %v173 = vld [vmem:[#allocation7 + $0x28] sm:$0xf]
    %v174 = vld [vmem:[#allocation7 + $0x2c] sm:$0xf]
    %v175 = vld [vmem:[#allocation7 + $0x30] sm:$0xf]
    %v176 = vld [vmem:[#allocation7 + $0x34] sm:$0xf]
    %v177 = vld [vmem:[#allocation7 + $0x38] sm:$0xf]
    %v178 = vld [vmem:[#allocation7 + $0x3c] sm:$0xf]
    %v179 = vld [vmem:[%s3] sm:$0x1]
    %v212 = vunpack.c.l.b16 %v99
    %v213 = vunpack.c.h.b16 %v99
    %v214 = vunpack.c.l.b16 %v100
    %v215 = vunpack.c.h.b16 %v100
    %v216 = vunpack.c.l.b16 %v101
    %v217 = vunpack.c.h.b16 %v101
    %v218 = vunpack.c.l.b16 %v102
    %v219 = vunpack.c.h.b16 %v102
    %v220 = vunpack.c.l.b16 %v103
    %v221 = vunpack.c.h.b16 %v103
    %v222 = vunpack.c.l.b16 %v104
    %v223 = vunpack.c.h.b16 %v104
    %v224 = vunpack.c.l.b16 %v105
    %v225 = vunpack.c.h.b16 %v105
    %v226 = vunpack.c.l.b16 %v106
    %v227 = vunpack.c.h.b16 %v106
    %v228 = vunpack.c.l.b16 %v107
    %v229 = vunpack.c.h.b16 %v107
    %v230 = vunpack.c.l.b16 %v108
    %v231 = vunpack.c.h.b16 %v108
    %v232 = vunpack.c.l.b16 %v109
    %v233 = vunpack.c.h.b16 %v109
    %v234 = vunpack.c.l.b16 %v110
    %v235 = vunpack.c.h.b16 %v110
    %v236 = vunpack.c.l.b16 %v111
    %v237 = vunpack.c.h.b16 %v111
    %v238 = vunpack.c.l.b16 %v112
    %v239 = vunpack.c.h.b16 %v112
    %v240 = vunpack.c.l.b16 %v113
    %v241 = vunpack.c.h.b16 %v113
    %v242 = vunpack.c.l.b16 %v114
    %v243 = vunpack.c.h.b16 %v114
    %v244 = vunpack.c.l.b16 %v115
    %v245 = vunpack.c.h.b16 %v115
    %v246 = vunpack.c.l.b16 %v116
    %v247 = vunpack.c.h.b16 %v116
    %v248 = vunpack.c.l.b16 %v117
    %v249 = vunpack.c.h.b16 %v117
    %v250 = vunpack.c.l.b16 %v118
    %v251 = vunpack.c.h.b16 %v118
    %v252 = vunpack.c.l.b16 %v119
    %v253 = vunpack.c.h.b16 %v119
    %v254 = vunpack.c.l.b16 %v120
    %v255 = vunpack.c.h.b16 %v120
    %v256 = vunpack.c.l.b16 %v121
    %v257 = vunpack.c.h.b16 %v121
    %v258 = vunpack.c.l.b16 %v122
    %v259 = vunpack.c.h.b16 %v122
    %v260 = vunpack.c.l.b16 %v123
    %v261 = vunpack.c.h.b16 %v123
    %v262 = vunpack.c.l.b16 %v124
    %v263 = vunpack.c.h.b16 %v124
    %v264 = vunpack.c.l.b16 %v125
    %v265 = vunpack.c.h.b16 %v125
    %v266 = vunpack.c.l.b16 %v126
    %v267 = vunpack.c.h.b16 %v126
    %v268 = vunpack.c.l.b16 %v127
    %v269 = vunpack.c.h.b16 %v127
    %v270 = vunpack.c.l.b16 %v128
    %v271 = vunpack.c.h.b16 %v128
    %v272 = vunpack.c.l.b16 %v129
    %v273 = vunpack.c.h.b16 %v129
    %v274 = vunpack.c.l.b16 %v130
    %v275 = vunpack.c.h.b16 %v130
    %v276 = vpack.c.b16 %v214, %v212
    %v277 = vpack.c.b16 %v215, %v213
    %v278 = vpack.c.b16 %v218, %v216
    %v279 = vpack.c.b16 %v219, %v217
    %v280 = vpack.c.b16 %v222, %v220
    %v281 = vpack.c.b16 %v223, %v221
    %v282 = vpack.c.b16 %v226, %v224
    %v283 = vpack.c.b16 %v227, %v225
    %v284 = vpack.c.b16 %v230, %v228
    %v285 = vpack.c.b16 %v231, %v229
    %v286 = vpack.c.b16 %v234, %v232
    %v287 = vpack.c.b16 %v235, %v233
    %v288 = vpack.c.b16 %v238, %v236
    %v289 = vpack.c.b16 %v239, %v237
    %v290 = vpack.c.b16 %v242, %v240
    %v291 = vpack.c.b16 %v243, %v241
    %v292 = vpack.c.b16 %v246, %v244
    %v293 = vpack.c.b16 %v247, %v245
    %v294 = vpack.c.b16 %v250, %v248
    %v295 = vpack.c.b16 %v251, %v249
    %v296 = vpack.c.b16 %v254, %v252
    %v297 = vpack.c.b16 %v255, %v253
    %v298 = vpack.c.b16 %v258, %v256
    %v299 = vpack.c.b16 %v259, %v257
    %v300 = vpack.c.b16 %v262, %v260
    %v301 = vpack.c.b16 %v263, %v261
    %v302 = vpack.c.b16 %v266, %v264
    %v303 = vpack.c.b16 %v267, %v265
    %v304 = vpack.c.b16 %v270, %v268
    %v305 = vpack.c.b16 %v271, %v269
    %v306 = vpack.c.b16 %v274, %v272
    %v307 = vpack.c.b16 %v275, %v273
    %v372 = vunpack.c.l.b16 %v131
    %v373 = vunpack.c.l.b16 %v132
    %v374 = vunpack.c.l.b16 %v133
    %v375 = vunpack.c.l.b16 %v134
    %v376 = vunpack.c.l.b16 %v135
    %v377 = vunpack.c.l.b16 %v136
    %v378 = vunpack.c.l.b16 %v137
    %v379 = vunpack.c.l.b16 %v138
    %v380 = vunpack.c.l.b16 %v139
    %v381 = vunpack.c.l.b16 %v140
    %v382 = vunpack.c.l.b16 %v141
    %v383 = vunpack.c.l.b16 %v142
    %v384 = vunpack.c.l.b16 %v143
    %v385 = vunpack.c.l.b16 %v144
    %v386 = vunpack.c.l.b16 %v145
    %v387 = vunpack.c.l.b16 %v146
    %v388 = vunpack.c.l.b16 %v147
    %v389 = vunpack.c.l.b16 %v148
    %v390 = vunpack.c.l.b16 %v149
    %v391 = vunpack.c.l.b16 %v150
    %v392 = vunpack.c.l.b16 %v151
    %v393 = vunpack.c.l.b16 %v152
    %v394 = vunpack.c.l.b16 %v153
    %v395 = vunpack.c.l.b16 %v154
    %v396 = vunpack.c.l.b16 %v155
    %v397 = vunpack.c.l.b16 %v156
    %v398 = vunpack.c.l.b16 %v157
    %v399 = vunpack.c.l.b16 %v158
    %v400 = vunpack.c.l.b16 %v159
    %v401 = vunpack.c.l.b16 %v160
    %v402 = vunpack.c.l.b16 %v161
    %v403 = vunpack.c.l.b16 %v162
    %v404 = vpack.c.b16 %v373, %v372
    %v405 = vpack.c.b16 %v375, %v374
    %v406 = vpack.c.b16 %v377, %v376
    %v407 = vpack.c.b16 %v379, %v378
    %v408 = vpack.c.b16 %v381, %v380
    %v409 = vpack.c.b16 %v383, %v382
    %v410 = vpack.c.b16 %v385, %v384
    %v411 = vpack.c.b16 %v387, %v386
    %v412 = vpack.c.b16 %v389, %v388
    %v413 = vpack.c.b16 %v391, %v390
    %v414 = vpack.c.b16 %v393, %v392
    %v415 = vpack.c.b16 %v395, %v394
    %v416 = vpack.c.b16 %v397, %v396
    %v417 = vpack.c.b16 %v399, %v398
    %v418 = vpack.c.b16 %v401, %v400
    %v419 = vpack.c.b16 %v403, %v402
    %436 = vmatprep.subr.bf16.mxu0 0
    %437 = vmatpush1.bf16.msra.mxu0 %v411
    %438 = vmatprep.subr.bf16.mxu0 0
    %439 = vmatpush1.bf16.msra.mxu0 %v410
    %440 = vmatprep.subr.bf16.mxu0 0
    %441 = vmatpush1.bf16.msra.mxu0 %v409
    %442 = vmatprep.subr.bf16.mxu0 0
    %443 = vmatpush1.bf16.msra.mxu0 %v408
    %444 = vmatprep.subr.bf16.mxu0 0
    %445 = vmatpush1.bf16.msra.mxu0 %v407
    %446 = vmatprep.subr.bf16.mxu0 0
    %447 = vmatpush1.bf16.msra.mxu0 %v406
    %448 = vmatprep.subr.bf16.mxu0 0
    %449 = vmatpush1.bf16.msra.mxu0 %v405
    %450 = vmatprep.subr.bf16.mxu0 0
    %451 = vmatpush1.bf16.msra.mxu0 %v404
    %452 = vmatprep.subr.bf16.mxu0 0
    %453 = vmatpush2.bf16.msra.mxu0 %v419
    %454 = vmatprep.subr.bf16.mxu0 0
    %455 = vmatpush2.bf16.msra.mxu0 %v418
    %456 = vmatprep.subr.bf16.mxu0 0
    %457 = vmatpush2.bf16.msra.mxu0 %v417
    %458 = vmatprep.subr.bf16.mxu0 0
    %459 = vmatpush2.bf16.msra.mxu0 %v416
    %460 = vmatprep.subr.bf16.mxu0 0
    %461 = vmatpush2.bf16.msra.mxu0 %v415
    %462 = vmatprep.subr.bf16.mxu0 0
    %463 = vmatpush2.bf16.msra.mxu0 %v414
    %464 = vmatprep.subr.bf16.mxu0 0
    %465 = vmatpush2.bf16.msra.mxu0 %v413
    %466 = vmatprep.subr.bf16.mxu0 0
    %467 = vmatpush2.bf16.msra.mxu0 %v412
    %468 = vmatprep.mubr.bf16.mxu0 %v277
    %469 = vmatmul.mubr.bf16.gmra.mxu0 %v276
    %v470 = vpop.f32.mrf.mxu0
    %v471 = vadd.f32 0.0, %v470
    %v472 = vpop.f32.mrf.mxu0
    %v473 = vpop.f32.mrf.mxu0
    %v474 = vadd.f32 0.0, %v473
    %v475 = vpop.f32.mrf.mxu0
    %476 = vmatprep.mubr.bf16.mxu0 %v279
    %477 = vmatmul.mubr.bf16.gmra.mxu0 %v278
    %v478 = vpop.f32.mrf.mxu0
    %v479 = vadd.f32 0.0, %v478
    %v480 = vpop.f32.mrf.mxu0
    %v481 = vpop.f32.mrf.mxu0
    %v482 = vadd.f32 0.0, %v481
    %v483 = vpop.f32.mrf.mxu0
    %484 = vmatprep.mubr.bf16.mxu0 %v281
    %485 = vmatmul.mubr.bf16.gmra.mxu0 %v280
    %v486 = vpop.f32.mrf.mxu0
    %v487 = vadd.f32 0.0, %v486
    %v488 = vpop.f32.mrf.mxu0
    %v489 = vpop.f32.mrf.mxu0
    %v490 = vadd.f32 0.0, %v489
    %v491 = vpop.f32.mrf.mxu0
    %492 = vmatprep.mubr.bf16.mxu0 %v283
    %493 = vmatmul.mubr.bf16.gmra.mxu0 %v282
    %v494 = vpop.f32.mrf.mxu0
    %v495 = vadd.f32 0.0, %v494
    %v496 = vpop.f32.mrf.mxu0
    %v497 = vpop.f32.mrf.mxu0
    %v498 = vadd.f32 0.0, %v497
    %v499 = vpop.f32.mrf.mxu0
    %500 = vmatprep.mubr.bf16.mxu0 %v285
    %501 = vmatmul.mubr.bf16.gmra.mxu0 %v284
    %v502 = vpop.f32.mrf.mxu0
    %v503 = vadd.f32 0.0, %v502
    %v504 = vpop.f32.mrf.mxu0
    %v505 = vpop.f32.mrf.mxu0
    %v506 = vadd.f32 0.0, %v505
    %v507 = vpop.f32.mrf.mxu0
    %508 = vmatprep.mubr.bf16.mxu0 %v287
    %509 = vmatmul.mubr.bf16.gmra.mxu0 %v286
    %v510 = vpop.f32.mrf.mxu0
    %v511 = vadd.f32 0.0, %v510
    %v512 = vpop.f32.mrf.mxu0
    %v513 = vpop.f32.mrf.mxu0
    %v514 = vadd.f32 0.0, %v513
    %v515 = vpop.f32.mrf.mxu0
    %516 = vmatprep.mubr.bf16.mxu0 %v289
    %517 = vmatmul.mubr.bf16.gmra.mxu0 %v288
    %v518 = vpop.f32.mrf.mxu0
    %v519 = vadd.f32 0.0, %v518
    %v520 = vpop.f32.mrf.mxu0
    %v521 = vpop.f32.mrf.mxu0
    %v522 = vadd.f32 0.0, %v521
    %v523 = vpop.f32.mrf.mxu0
    %524 = vmatprep.mubr.bf16.mxu0 %v291
    %525 = vmatmul.mubr.bf16.gmra.mxu0 %v290
    %v526 = vpop.f32.mrf.mxu0
    %v527 = vadd.f32 0.0, %v526
    %v528 = vpop.f32.mrf.mxu0
    %v529 = vpop.f32.mrf.mxu0
    %v530 = vadd.f32 0.0, %v529
    %v531 = vpop.f32.mrf.mxu0
    %532 = vmatprep.mubr.bf16.mxu0 %v293
    %533 = vmatmul.mubr.bf16.gmra.mxu0 %v292
    %v534 = vpop.f32.mrf.mxu0
    %v535 = vadd.f32 0.0, %v534
    %v536 = vpop.f32.mrf.mxu0
    %v537 = vpop.f32.mrf.mxu0
    %v538 = vadd.f32 0.0, %v537
    %v539 = vpop.f32.mrf.mxu0
    %540 = vmatprep.mubr.bf16.mxu0 %v295
    %541 = vmatmul.mubr.bf16.gmra.mxu0 %v294
    %v542 = vpop.f32.mrf.mxu0
    %v543 = vadd.f32 0.0, %v542
    %v544 = vpop.f32.mrf.mxu0
    %v545 = vpop.f32.mrf.mxu0
    %v546 = vadd.f32 0.0, %v545
    %v547 = vpop.f32.mrf.mxu0
    %548 = vmatprep.mubr.bf16.mxu0 %v297
    %549 = vmatmul.mubr.bf16.gmra.mxu0 %v296
    %v550 = vpop.f32.mrf.mxu0
    %v551 = vadd.f32 0.0, %v550
    %v552 = vpop.f32.mrf.mxu0
    %v553 = vpop.f32.mrf.mxu0
    %v554 = vadd.f32 0.0, %v553
    %v555 = vpop.f32.mrf.mxu0
    %556 = vmatprep.mubr.bf16.mxu0 %v299
    %557 = vmatmul.mubr.bf16.gmra.mxu0 %v298
    %v558 = vpop.f32.mrf.mxu0
    %v559 = vadd.f32 0.0, %v558
    %v560 = vpop.f32.mrf.mxu0
    %v561 = vpop.f32.mrf.mxu0
    %v562 = vadd.f32 0.0, %v561
    %v563 = vpop.f32.mrf.mxu0
    %564 = vmatprep.mubr.bf16.mxu0 %v301
    %565 = vmatmul.mubr.bf16.gmra.mxu0 %v300
    %v566 = vpop.f32.mrf.mxu0
    %v567 = vadd.f32 0.0, %v566
    %v568 = vpop.f32.mrf.mxu0
    %v569 = vpop.f32.mrf.mxu0
    %v570 = vadd.f32 0.0, %v569
    %v571 = vpop.f32.mrf.mxu0
    %572 = vmatprep.mubr.bf16.mxu0 %v303
    %573 = vmatmul.mubr.bf16.gmra.mxu0 %v302
    %v574 = vpop.f32.mrf.mxu0
    %v575 = vadd.f32 0.0, %v574
    %v576 = vpop.f32.mrf.mxu0
    %v577 = vpop.f32.mrf.mxu0
    %v578 = vadd.f32 0.0, %v577
    %v579 = vpop.f32.mrf.mxu0
    %580 = vmatprep.mubr.bf16.mxu0 %v305
    %581 = vmatmul.mubr.bf16.gmra.mxu0 %v304
    %v582 = vpop.f32.mrf.mxu0
    %v583 = vadd.f32 0.0, %v582
    %v584 = vpop.f32.mrf.mxu0
    %v585 = vpop.f32.mrf.mxu0
    %v586 = vadd.f32 0.0, %v585
    %v587 = vpop.f32.mrf.mxu0
    %588 = vmatprep.mubr.bf16.mxu0 %v307
    %589 = vmatmul.mubr.bf16.gmra.mxu0 %v306
    %v590 = vpop.f32.mrf.mxu0
    %v591 = vadd.f32 0.0, %v590
    %v592 = vpop.f32.mrf.mxu0
    %v593 = vpop.f32.mrf.mxu0
    %v594 = vadd.f32 0.0, %v593
    %v595 = vpop.f32.mrf.mxu0
    %596 = vdwg.mxu0
    %v597 = vpack.c.bf16 %v474, %v471
    %v598 = vpack.c.bf16 %v482, %v479
    %v599 = vpack.c.bf16 %v490, %v487
    %v600 = vpack.c.bf16 %v498, %v495
    %v601 = vpack.c.bf16 %v506, %v503
    %v602 = vpack.c.bf16 %v514, %v511
    %v603 = vpack.c.bf16 %v522, %v519
    %v604 = vpack.c.bf16 %v530, %v527
    %v605 = vpack.c.bf16 %v538, %v535
    %v606 = vpack.c.bf16 %v546, %v543
    %v607 = vpack.c.bf16 %v554, %v551
    %v608 = vpack.c.bf16 %v562, %v559
    %v609 = vpack.c.bf16 %v570, %v567
    %v610 = vpack.c.bf16 %v578, %v575
    %v611 = vpack.c.bf16 %v586, %v583
    %v612 = vpack.c.bf16 %v594, %v591
    %v614 = vlaneseq
    %v615 = vshrl.u32 %v614, 7
    %v616 = vsub.s32 0, %v615
    %v617 = vrot.slane %v179, %v616
    %v635 = vunpack.c.l.b16 %v163
    %v636 = vunpack.c.l.b16 %v164
    %v637 = vunpack.c.l.b16 %v165
    %v638 = vunpack.c.l.b16 %v166
    %v639 = vunpack.c.l.b16 %v167
    %v640 = vunpack.c.l.b16 %v168
    %v641 = vunpack.c.l.b16 %v169
    %v642 = vunpack.c.l.b16 %v170
    %v643 = vunpack.c.l.b16 %v171
    %v644 = vunpack.c.l.b16 %v172
    %v645 = vunpack.c.l.b16 %v173
    %v646 = vunpack.c.l.b16 %v174
    %v647 = vunpack.c.l.b16 %v175
    %v648 = vunpack.c.l.b16 %v176
    %v649 = vunpack.c.l.b16 %v177
    %v650 = vunpack.c.l.b16 %v178
    %v651 = vpack.c.b16 %v636, %v635
    %v652 = vpack.c.b16 %v638, %v637
    %v653 = vpack.c.b16 %v640, %v639
    %v654 = vpack.c.b16 %v642, %v641
    %v655 = vpack.c.b16 %v644, %v643
    %v656 = vpack.c.b16 %v646, %v645
    %v657 = vpack.c.b16 %v648, %v647
    %v658 = vpack.c.b16 %v650, %v649
    %667 = vmatprep.subr.bf16.mxu0 0
    %668 = vmatpush1.bf16.msra.mxu0 %v658
    %669 = vmatprep.subr.bf16.mxu0 0
    %670 = vmatpush1.bf16.msra.mxu0 %v657
    %671 = vmatprep.subr.bf16.mxu0 0
    %672 = vmatpush1.bf16.msra.mxu0 %v656
    %673 = vmatprep.subr.bf16.mxu0 0
    %674 = vmatpush1.bf16.msra.mxu0 %v655
    %675 = vmatprep.subr.bf16.mxu0 0
    %676 = vmatpush1.bf16.msra.mxu0 %v654
    %677 = vmatprep.subr.bf16.mxu0 0
    %678 = vmatpush1.bf16.msra.mxu0 %v653
    %679 = vmatprep.subr.bf16.mxu0 0
    %680 = vmatpush1.bf16.msra.mxu0 %v652
    %681 = vmatprep.subr.bf16.mxu0 0
    %682 = vmatpush1.bf16.msra.mxu0 %v651
    %683 = vmatprep.subr.bf16.mxu0 0
    %684 = vmatpush2.bf16.msra.mxu0 0
    %685 = vmatprep.subr.bf16.mxu0 0
    %686 = vmatpush2.bf16.msra.mxu0 0
    %687 = vmatprep.subr.bf16.mxu0 0
    %688 = vmatpush2.bf16.msra.mxu0 0
    %689 = vmatprep.subr.bf16.mxu0 0
    %690 = vmatpush2.bf16.msra.mxu0 0
    %691 = vmatprep.subr.bf16.mxu0 0
    %692 = vmatpush2.bf16.msra.mxu0 0
    %693 = vmatprep.subr.bf16.mxu0 0
    %694 = vmatpush2.bf16.msra.mxu0 0
    %695 = vmatprep.subr.bf16.mxu0 0
    %696 = vmatpush2.bf16.msra.mxu0 0
    %697 = vmatprep.subr.bf16.mxu0 0
    %698 = vmatpush2.bf16.msra.mxu0 0
    %699 = vmatprep.mubr.bf16.mxu0 0
    %700 = vmatmul.mubr.bf16.gmra.mxu0 %v597
    %v701 = vpop.f32.mrf.mxu0
    %v702 = vadd.f32 %v617, %v701
    %v703 = vpop.f32.mrf.mxu0
    %v704 = vpop.f32.mrf.mxu0
    %v705 = vadd.f32 %v617, %v704
    %v706 = vpop.f32.mrf.mxu0
    %707 = vmatprep.mubr.bf16.mxu0 0
    %708 = vmatmul.mubr.bf16.gmra.mxu0 %v598
    %v709 = vpop.f32.mrf.mxu0
    %v710 = vadd.f32 %v617, %v709
    %v711 = vpop.f32.mrf.mxu0
    %v712 = vpop.f32.mrf.mxu0
    %v713 = vadd.f32 %v617, %v712
    %v714 = vpop.f32.mrf.mxu0
    %715 = vmatprep.mubr.bf16.mxu0 0
    %716 = vmatmul.mubr.bf16.gmra.mxu0 %v599
    %v717 = vpop.f32.mrf.mxu0
    %v718 = vadd.f32 %v617, %v717
    %v719 = vpop.f32.mrf.mxu0
    %v720 = vpop.f32.mrf.mxu0
    %v721 = vadd.f32 %v617, %v720
    %v722 = vpop.f32.mrf.mxu0
    %723 = vmatprep.mubr.bf16.mxu0 0
    %724 = vmatmul.mubr.bf16.gmra.mxu0 %v600
    %v725 = vpop.f32.mrf.mxu0
    %v726 = vadd.f32 %v617, %v725
    %v727 = vpop.f32.mrf.mxu0
    %v728 = vpop.f32.mrf.mxu0
    %v729 = vadd.f32 %v617, %v728
    %v730 = vpop.f32.mrf.mxu0
    %731 = vmatprep.mubr.bf16.mxu0 0
    %732 = vmatmul.mubr.bf16.gmra.mxu0 %v601
    %v733 = vpop.f32.mrf.mxu0
    %v734 = vadd.f32 %v617, %v733
    %v735 = vpop.f32.mrf.mxu0
    %v736 = vpop.f32.mrf.mxu0
    %v737 = vadd.f32 %v617, %v736
    %v738 = vpop.f32.mrf.mxu0
    %739 = vmatprep.mubr.bf16.mxu0 0
    %740 = vmatmul.mubr.bf16.gmra.mxu0 %v602
    %v741 = vpop.f32.mrf.mxu0
    %v742 = vadd.f32 %v617, %v741
    %v743 = vpop.f32.mrf.mxu0
    %v744 = vpop.f32.mrf.mxu0
    %v745 = vadd.f32 %v617, %v744
    %v746 = vpop.f32.mrf.mxu0
    %747 = vmatprep.mubr.bf16.mxu0 0
    %748 = vmatmul.mubr.bf16.gmra.mxu0 %v603
    %v749 = vpop.f32.mrf.mxu0
    %v750 = vadd.f32 %v617, %v749
    %v751 = vpop.f32.mrf.mxu0
    %v752 = vpop.f32.mrf.mxu0
    %v753 = vadd.f32 %v617, %v752
    %v754 = vpop.f32.mrf.mxu0
    %755 = vmatprep.mubr.bf16.mxu0 0
    %756 = vmatmul.mubr.bf16.gmra.mxu0 %v604
    %v757 = vpop.f32.mrf.mxu0
    %v758 = vadd.f32 %v617, %v757
    %v759 = vpop.f32.mrf.mxu0
    %v760 = vpop.f32.mrf.mxu0
    %v761 = vadd.f32 %v617, %v760
    %v762 = vpop.f32.mrf.mxu0
    %763 = vmatprep.mubr.bf16.mxu0 0
    %764 = vmatmul.mubr.bf16.gmra.mxu0 %v605
    %v765 = vpop.f32.mrf.mxu0
    %v766 = vadd.f32 %v617, %v765
    %v767 = vpop.f32.mrf.mxu0
    %v768 = vpop.f32.mrf.mxu0
    %v769 = vadd.f32 %v617, %v768
    %v770 = vpop.f32.mrf.mxu0
    %771 = vmatprep.mubr.bf16.mxu0 0
    %772 = vmatmul.mubr.bf16.gmra.mxu0 %v606
    %v773 = vpop.f32.mrf.mxu0
    %v774 = vadd.f32 %v617, %v773
    %v775 = vpop.f32.mrf.mxu0
    %v776 = vpop.f32.mrf.mxu0
    %v777 = vadd.f32 %v617, %v776
    %v778 = vpop.f32.mrf.mxu0
    %779 = vmatprep.mubr.bf16.mxu0 0
    %780 = vmatmul.mubr.bf16.gmra.mxu0 %v607
    %v781 = vpop.f32.mrf.mxu0
    %v782 = vadd.f32 %v617, %v781
    %v783 = vpop.f32.mrf.mxu0
    %v784 = vpop.f32.mrf.mxu0
    %v785 = vadd.f32 %v617, %v784
    %v786 = vpop.f32.mrf.mxu0
    %787 = vmatprep.mubr.bf16.mxu0 0
    %788 = vmatmul.mubr.bf16.gmra.mxu0 %v608
    %v789 = vpop.f32.mrf.mxu0
    %v790 = vadd.f32 %v617, %v789
    %v791 = vpop.f32.mrf.mxu0
    %v792 = vpop.f32.mrf.mxu0
    %v793 = vadd.f32 %v617, %v792
    %v794 = vpop.f32.mrf.mxu0
    %795 = vmatprep.mubr.bf16.mxu0 0
    %796 = vmatmul.mubr.bf16.gmra.mxu0 %v609
    %v797 = vpop.f32.mrf.mxu0
    %v798 = vadd.f32 %v617, %v797
    %v799 = vpop.f32.mrf.mxu0
    %v800 = vpop.f32.mrf.mxu0
    %v801 = vadd.f32 %v617, %v800
    %v802 = vpop.f32.mrf.mxu0
    %803 = vmatprep.mubr.bf16.mxu0 0
    %804 = vmatmul.mubr.bf16.gmra.mxu0 %v610
    %v805 = vpop.f32.mrf.mxu0
    %v806 = vadd.f32 %v617, %v805
    %v807 = vpop.f32.mrf.mxu0
    %v808 = vpop.f32.mrf.mxu0
    %v809 = vadd.f32 %v617, %v808
    %v810 = vpop.f32.mrf.mxu0
    %811 = vmatprep.mubr.bf16.mxu0 0
    %812 = vmatmul.mubr.bf16.gmra.mxu0 %v611
    %v813 = vpop.f32.mrf.mxu0
    %v814 = vadd.f32 %v617, %v813
    %v815 = vpop.f32.mrf.mxu0
    %v816 = vpop.f32.mrf.mxu0
    %v817 = vadd.f32 %v617, %v816
    %v818 = vpop.f32.mrf.mxu0
    %819 = vmatprep.mubr.bf16.mxu0 0
    %820 = vmatmul.mubr.bf16.gmra.mxu0 %v612
    %v821 = vpop.f32.mrf.mxu0
    %v822 = vadd.f32 %v617, %v821
    %v823 = vpop.f32.mrf.mxu0
    %v824 = vpop.f32.mrf.mxu0
    %v825 = vadd.f32 %v617, %v824
    %v826 = vpop.f32.mrf.mxu0
    %827 = vdwg.mxu0
    %v828 = vmul.f32 %v702, 0.2
    %v829 = vmul.f32 %v705, 0.2
    %v830 = vmul.f32 %v710, 0.2
    %v831 = vmul.f32 %v713, 0.2
    %v832 = vmul.f32 %v718, 0.2
    %v833 = vmul.f32 %v721, 0.2
    %v834 = vmul.f32 %v726, 0.2
    %v835 = vmul.f32 %v729, 0.2
    %v836 = vmul.f32 %v734, 0.2
    %v837 = vmul.f32 %v737, 0.2
    %v838 = vmul.f32 %v742, 0.2
    %v839 = vmul.f32 %v745, 0.2
    %v840 = vmul.f32 %v750, 0.2
    %v841 = vmul.f32 %v753, 0.2
    %v842 = vmul.f32 %v758, 0.2
    %v843 = vmul.f32 %v761, 0.2
    %v844 = vmul.f32 %v766, 0.2
    %v845 = vmul.f32 %v769, 0.2
    %v846 = vmul.f32 %v774, 0.2
    %v847 = vmul.f32 %v777, 0.2
    %v848 = vmul.f32 %v782, 0.2
    %v849 = vmul.f32 %v785, 0.2
    %v850 = vmul.f32 %v790, 0.2
    %v851 = vmul.f32 %v793, 0.2
    %v852 = vmul.f32 %v798, 0.2
    %v853 = vmul.f32 %v801, 0.2
    %v854 = vmul.f32 %v806, 0.2
    %v855 = vmul.f32 %v809, 0.2
    %v856 = vmul.f32 %v814, 0.2
    %v857 = vmul.f32 %v817, 0.2
    %v858 = vmul.f32 %v822, 0.2
    %v859 = vmul.f32 %v825, 0.2
    %v860 = vmax.f32 %v702, %v828
    %v861 = vmax.f32 %v705, %v829
    %v862 = vmax.f32 %v710, %v830
    %v863 = vmax.f32 %v713, %v831
    %v864 = vmax.f32 %v718, %v832
    %v865 = vmax.f32 %v721, %v833
    %v866 = vmax.f32 %v726, %v834
    %v867 = vmax.f32 %v729, %v835
    %v868 = vmax.f32 %v734, %v836
    %v869 = vmax.f32 %v737, %v837
    %v870 = vmax.f32 %v742, %v838
    %v871 = vmax.f32 %v745, %v839
    %v872 = vmax.f32 %v750, %v840
    %v873 = vmax.f32 %v753, %v841
    %v874 = vmax.f32 %v758, %v842
    %v875 = vmax.f32 %v761, %v843
    %v876 = vmax.f32 %v766, %v844
    %v877 = vmax.f32 %v769, %v845
    %v878 = vmax.f32 %v774, %v846
    %v879 = vmax.f32 %v777, %v847
    %v880 = vmax.f32 %v782, %v848
    %v881 = vmax.f32 %v785, %v849
    %v882 = vmax.f32 %v790, %v850
    %v883 = vmax.f32 %v793, %v851
    %v884 = vmax.f32 %v798, %v852
    %v885 = vmax.f32 %v801, %v853
    %v886 = vmax.f32 %v806, %v854
    %v887 = vmax.f32 %v809, %v855
    %v888 = vmax.f32 %v814, %v856
    %v889 = vmax.f32 %v817, %v857
    %v890 = vmax.f32 %v822, %v858
    %v891 = vmax.f32 %v825, %v859
    %v892 = vpack.c.bf16 %v861, %v860
    %v893 = vpack.c.bf16 %v863, %v862
    %v894 = vpack.c.bf16 %v865, %v864
    %v895 = vpack.c.bf16 %v867, %v866
    %v896 = vpack.c.bf16 %v869, %v868
    %v897 = vpack.c.bf16 %v871, %v870
    %v898 = vpack.c.bf16 %v873, %v872
    %v899 = vpack.c.bf16 %v875, %v874
    %v900 = vpack.c.bf16 %v877, %v876
    %v901 = vpack.c.bf16 %v879, %v878
    %v902 = vpack.c.bf16 %v881, %v880
    %v903 = vpack.c.bf16 %v883, %v882
    %v904 = vpack.c.bf16 %v885, %v884
    %v905 = vpack.c.bf16 %v887, %v886
    %v906 = vpack.c.bf16 %v889, %v888
    %v907 = vpack.c.bf16 %v891, %v890
    %v908 = vld [vmem:[#allocation8] sm:$0xf]
    %v909 = vld [vmem:[#allocation8 + $0x4] sm:$0xf]
    %v910 = vld [vmem:[#allocation8 + $0x8] sm:$0xf]
    %v911 = vld [vmem:[#allocation8 + $0xc] sm:$0xf]
    %v912 = vld [vmem:[#allocation8 + $0x10] sm:$0xf]
    %v913 = vld [vmem:[#allocation8 + $0x14] sm:$0xf]
    %v914 = vld [vmem:[#allocation8 + $0x18] sm:$0xf]
    %v915 = vld [vmem:[#allocation8 + $0x1c] sm:$0xf]
    %v916 = vld [vmem:[#allocation8 + $0x20] sm:$0xf]
    %v917 = vld [vmem:[#allocation8 + $0x24] sm:$0xf]
    %v918 = vld [vmem:[#allocation8 + $0x28] sm:$0xf]
    %v919 = vld [vmem:[#allocation8 + $0x2c] sm:$0xf]
    %v920 = vld [vmem:[#allocation8 + $0x30] sm:$0xf]
    %v921 = vld [vmem:[#allocation8 + $0x34] sm:$0xf]
    %v922 = vld [vmem:[#allocation8 + $0x38] sm:$0xf]
    %v923 = vld [vmem:[#allocation8 + $0x3c] sm:$0xf]
    %v924 = vld [vmem:[%s5] sm:$0x1]
    %925 = vmatprep.subr.bf16.mxu0 0
    %926 = vmatpush1.bf16.msra.mxu0 %v899
    %927 = vmatprep.subr.bf16.mxu0 0
    %928 = vmatpush1.bf16.msra.mxu0 %v898
    %929 = vmatprep.subr.bf16.mxu0 0
    %930 = vmatpush1.bf16.msra.mxu0 %v897
    %931 = vmatprep.subr.bf16.mxu0 0
    %932 = vmatpush1.bf16.msra.mxu0 %v896
    %933 = vmatprep.subr.bf16.mxu0 0
    %934 = vmatpush1.bf16.msra.mxu0 %v895
    %935 = vmatprep.subr.bf16.mxu0 0
    %936 = vmatpush1.bf16.msra.mxu0 %v894
    %937 = vmatprep.subr.bf16.mxu0 0
    %938 = vmatpush1.bf16.msra.mxu0 %v893
    %939 = vmatprep.subr.bf16.mxu0 0
    %940 = vmatpush1.bf16.msra.mxu0 %v892
    %941 = vmatprep.subr.bf16.mxu0 0
    %942 = vmatpush2.bf16.msra.mxu0 %v907
    %943 = vmatprep.subr.bf16.mxu0 0
    %944 = vmatpush2.bf16.msra.mxu0 %v906
    %945 = vmatprep.subr.bf16.mxu0 0
    %946 = vmatpush2.bf16.msra.mxu0 %v905
    %947 = vmatprep.subr.bf16.mxu0 0
    %948 = vmatpush2.bf16.msra.mxu0 %v904
    %949 = vmatprep.subr.bf16.mxu0 0
    %950 = vmatpush2.bf16.msra.mxu0 %v903
    %951 = vmatprep.subr.bf16.mxu0 0
    %952 = vmatpush2.bf16.msra.mxu0 %v902
    %953 = vmatprep.subr.bf16.mxu0 0
    %954 = vmatpush2.bf16.msra.mxu0 %v901
    %955 = vmatprep.subr.bf16.mxu0 0
    %956 = vmatpush2.bf16.msra.mxu0 %v900
    %957 = vmatprep.mubr.bf16.mxu0 %v277
    %958 = vmatmul.mubr.bf16.gmra.mxu0 %v276
    %v959 = vpop.f32.mrf.mxu0
    %v960 = vadd.f32 0.0, %v959
    %v961 = vpop.f32.mrf.mxu0
    %v962 = vpop.f32.mrf.mxu0
    %v963 = vadd.f32 0.0, %v962
    %v964 = vpop.f32.mrf.mxu0
    %965 = vmatprep.mubr.bf16.mxu0 %v279
    %966 = vmatmul.mubr.bf16.gmra.mxu0 %v278
    %v967 = vpop.f32.mrf.mxu0
    %v968 = vadd.f32 0.0, %v967
    %v969 = vpop.f32.mrf.mxu0
    %v970 = vpop.f32.mrf.mxu0
    %v971 = vadd.f32 0.0, %v970
    %v972 = vpop.f32.mrf.mxu0
    %973 = vmatprep.mubr.bf16.mxu0 %v281
    %974 = vmatmul.mubr.bf16.gmra.mxu0 %v280
    %v975 = vpop.f32.mrf.mxu0
    %v976 = vadd.f32 0.0, %v975
    %v977 = vpop.f32.mrf.mxu0
    %v978 = vpop.f32.mrf.mxu0
    %v979 = vadd.f32 0.0, %v978
    %v980 = vpop.f32.mrf.mxu0
    %981 = vmatprep.mubr.bf16.mxu0 %v283
    %982 = vmatmul.mubr.bf16.gmra.mxu0 %v282
    %v983 = vpop.f32.mrf.mxu0
    %v984 = vadd.f32 0.0, %v983
    %v985 = vpop.f32.mrf.mxu0
    %v986 = vpop.f32.mrf.mxu0
    %v987 = vadd.f32 0.0, %v986
    %v988 = vpop.f32.mrf.mxu0
    %989 = vmatprep.mubr.bf16.mxu0 %v285
    %990 = vmatmul.mubr.bf16.gmra.mxu0 %v284
    %v991 = vpop.f32.mrf.mxu0
    %v992 = vadd.f32 0.0, %v991
    %v993 = vpop.f32.mrf.mxu0
    %v994 = vpop.f32.mrf.mxu0
    %v995 = vadd.f32 0.0, %v994
    %v996 = vpop.f32.mrf.mxu0
    %997 = vmatprep.mubr.bf16.mxu0 %v287
    %998 = vmatmul.mubr.bf16.gmra.mxu0 %v286
    %v999 = vpop.f32.mrf.mxu0
    %v1000 = vadd.f32 0.0, %v999
    %v1001 = vpop.f32.mrf.mxu0
    %v1002 = vpop.f32.mrf.mxu0
    %v1003 = vadd.f32 0.0, %v1002
    %v1004 = vpop.f32.mrf.mxu0
    %1005 = vmatprep.mubr.bf16.mxu0 %v289
    %1006 = vmatmul.mubr.bf16.gmra.mxu0 %v288
    %v1007 = vpop.f32.mrf.mxu0
    %v1008 = vadd.f32 0.0, %v1007
    %v1009 = vpop.f32.mrf.mxu0
    %v1010 = vpop.f32.mrf.mxu0
    %v1011 = vadd.f32 0.0, %v1010
    %v1012 = vpop.f32.mrf.mxu0
    %1013 = vmatprep.mubr.bf16.mxu0 %v291
    %1014 = vmatmul.mubr.bf16.gmra.mxu0 %v290
    %v1015 = vpop.f32.mrf.mxu0
    %v1016 = vadd.f32 0.0, %v1015
    %v1017 = vpop.f32.mrf.mxu0
    %v1018 = vpop.f32.mrf.mxu0
    %v1019 = vadd.f32 0.0, %v1018
    %v1020 = vpop.f32.mrf.mxu0
    %1021 = vmatprep.mubr.bf16.mxu0 %v293
    %1022 = vmatmul.mubr.bf16.gmra.mxu0 %v292
    %v1023 = vpop.f32.mrf.mxu0
    %v1024 = vadd.f32 0.0, %v1023
    %v1025 = vpop.f32.mrf.mxu0
    %v1026 = vpop.f32.mrf.mxu0
    %v1027 = vadd.f32 0.0, %v1026
    %v1028 = vpop.f32.mrf.mxu0
    %1029 = vmatprep.mubr.bf16.mxu0 %v295
    %1030 = vmatmul.mubr.bf16.gmra.mxu0 %v294
    %v1031 = vpop.f32.mrf.mxu0
    %v1032 = vadd.f32 0.0, %v1031
    %v1033 = vpop.f32.mrf.mxu0
    %v1034 = vpop.f32.mrf.mxu0
    %v1035 = vadd.f32 0.0, %v1034
    %v1036 = vpop.f32.mrf.mxu0
    %1037 = vmatprep.mubr.bf16.mxu0 %v297
    %1038 = vmatmul.mubr.bf16.gmra.mxu0 %v296
    %v1039 = vpop.f32.mrf.mxu0
    %v1040 = vadd.f32 0.0, %v1039
    %v1041 = vpop.f32.mrf.mxu0
    %v1042 = vpop.f32.mrf.mxu0
    %v1043 = vadd.f32 0.0, %v1042
    %v1044 = vpop.f32.mrf.mxu0
    %1045 = vmatprep.mubr.bf16.mxu0 %v299
    %1046 = vmatmul.mubr.bf16.gmra.mxu0 %v298
    %v1047 = vpop.f32.mrf.mxu0
    %v1048 = vadd.f32 0.0, %v1047
    %v1049 = vpop.f32.mrf.mxu0
    %v1050 = vpop.f32.mrf.mxu0
    %v1051 = vadd.f32 0.0, %v1050
    %v1052 = vpop.f32.mrf.mxu0
    %1053 = vmatprep.mubr.bf16.mxu0 %v301
    %1054 = vmatmul.mubr.bf16.gmra.mxu0 %v300
    %v1055 = vpop.f32.mrf.mxu0
    %v1056 = vadd.f32 0.0, %v1055
    %v1057 = vpop.f32.mrf.mxu0
    %v1058 = vpop.f32.mrf.mxu0
    %v1059 = vadd.f32 0.0, %v1058
    %v1060 = vpop.f32.mrf.mxu0
    %1061 = vmatprep.mubr.bf16.mxu0 %v303
    %1062 = vmatmul.mubr.bf16.gmra.mxu0 %v302
    %v1063 = vpop.f32.mrf.mxu0
    %v1064 = vadd.f32 0.0, %v1063
    %v1065 = vpop.f32.mrf.mxu0
    %v1066 = vpop.f32.mrf.mxu0
    %v1067 = vadd.f32 0.0, %v1066
    %v1068 = vpop.f32.mrf.mxu0
    %1069 = vmatprep.mubr.bf16.mxu0 %v305
    %1070 = vmatmul.mubr.bf16.gmra.mxu0 %v304
    %v1071 = vpop.f32.mrf.mxu0
    %v1072 = vadd.f32 0.0, %v1071
    %v1073 = vpop.f32.mrf.mxu0
    %v1074 = vpop.f32.mrf.mxu0
    %v1075 = vadd.f32 0.0, %v1074
    %v1076 = vpop.f32.mrf.mxu0
    %1077 = vmatprep.mubr.bf16.mxu0 %v307
    %1078 = vmatmul.mubr.bf16.gmra.mxu0 %v306
    %v1079 = vpop.f32.mrf.mxu0
    %v1080 = vadd.f32 0.0, %v1079
    %v1081 = vpop.f32.mrf.mxu0
    %v1082 = vpop.f32.mrf.mxu0
    %v1083 = vadd.f32 0.0, %v1082
    %v1084 = vpop.f32.mrf.mxu0
    %1085 = vdwg.mxu0
    %v1086 = vpack.c.bf16 %v963, %v960
    %v1087 = vpack.c.bf16 %v971, %v968
    %v1088 = vpack.c.bf16 %v979, %v976
    %v1089 = vpack.c.bf16 %v987, %v984
    %v1090 = vpack.c.bf16 %v995, %v992
    %v1091 = vpack.c.bf16 %v1003, %v1000
    %v1092 = vpack.c.bf16 %v1011, %v1008
    %v1093 = vpack.c.bf16 %v1019, %v1016
    %v1094 = vpack.c.bf16 %v1027, %v1024
    %v1095 = vpack.c.bf16 %v1035, %v1032
    %v1096 = vpack.c.bf16 %v1043, %v1040
    %v1097 = vpack.c.bf16 %v1051, %v1048
    %v1098 = vpack.c.bf16 %v1059, %v1056
    %v1099 = vpack.c.bf16 %v1067, %v1064
    %v1100 = vpack.c.bf16 %v1075, %v1072
    %v1101 = vpack.c.bf16 %v1083, %v1080
    %v1103 = vlaneseq
    %v1104 = vshrl.u32 %v1103, 7
    %v1105 = vsub.s32 0, %v1104
    %v1106 = vrot.slane %v924, %v1105
    %v1124 = vunpack.c.l.b16 %v908
    %v1125 = vunpack.c.l.b16 %v909
    %v1126 = vunpack.c.l.b16 %v910
    %v1127 = vunpack.c.l.b16 %v911
    %v1128 = vunpack.c.l.b16 %v912
    %v1129 = vunpack.c.l.b16 %v913
    %v1130 = vunpack.c.l.b16 %v914
    %v1131 = vunpack.c.l.b16 %v915
    %v1132 = vunpack.c.l.b16 %v916
    %v1133 = vunpack.c.l.b16 %v917
    %v1134 = vunpack.c.l.b16 %v918
    %v1135 = vunpack.c.l.b16 %v919
    %v1136 = vunpack.c.l.b16 %v920
    %v1137 = vunpack.c.l.b16 %v921
    %v1138 = vunpack.c.l.b16 %v922
    %v1139 = vunpack.c.l.b16 %v923
    %v1140 = vpack.c.b16 %v1125, %v1124
    %v1141 = vpack.c.b16 %v1127, %v1126
    %v1142 = vpack.c.b16 %v1129, %v1128
    %v1143 = vpack.c.b16 %v1131, %v1130
    %v1144 = vpack.c.b16 %v1133, %v1132
    %v1145 = vpack.c.b16 %v1135, %v1134
    %v1146 = vpack.c.b16 %v1137, %v1136
    %v1147 = vpack.c.b16 %v1139, %v1138
    %1156 = vmatprep.subr.bf16.mxu0 0
    %1157 = vmatpush1.bf16.msra.mxu0 %v1147
    %1158 = vmatprep.subr.bf16.mxu0 0
    %1159 = vmatpush1.bf16.msra.mxu0 %v1146
    %1160 = vmatprep.subr.bf16.mxu0 0
    %1161 = vmatpush1.bf16.msra.mxu0 %v1145
    %1162 = vmatprep.subr.bf16.mxu0 0
    %1163 = vmatpush1.bf16.msra.mxu0 %v1144
    %1164 = vmatprep.subr.bf16.mxu0 0
    %1165 = vmatpush1.bf16.msra.mxu0 %v1143
    %1166 = vmatprep.subr.bf16.mxu0 0
    %1167 = vmatpush1.bf16.msra.mxu0 %v1142
    %1168 = vmatprep.subr.bf16.mxu0 0
    %1169 = vmatpush1.bf16.msra.mxu0 %v1141
    %1170 = vmatprep.subr.bf16.mxu0 0
    %1171 = vmatpush1.bf16.msra.mxu0 %v1140
    %1172 = vmatprep.subr.bf16.mxu0 0
    %1173 = vmatpush2.bf16.msra.mxu0 0
    %1174 = vmatprep.subr.bf16.mxu0 0
    %1175 = vmatpush2.bf16.msra.mxu0 0
    %1176 = vmatprep.subr.bf16.mxu0 0
    %1177 = vmatpush2.bf16.msra.mxu0 0
    %1178 = vmatprep.subr.bf16.mxu0 0
    %1179 = vmatpush2.bf16.msra.mxu0 0
    %1180 = vmatprep.subr.bf16.mxu0 0
    %1181 = vmatpush2.bf16.msra.mxu0 0
    %1182 = vmatprep.subr.bf16.mxu0 0
    %1183 = vmatpush2.bf16.msra.mxu0 0
    %1184 = vmatprep.subr.bf16.mxu0 0
    %1185 = vmatpush2.bf16.msra.mxu0 0
    %1186 = vmatprep.subr.bf16.mxu0 0
    %1187 = vmatpush2.bf16.msra.mxu0 0
    %1188 = vmatprep.mubr.bf16.mxu0 0
    %1189 = vmatmul.mubr.bf16.gmra.mxu0 %v1086
    %v1190 = vpop.f32.mrf.mxu0
    %v1191 = vadd.f32 %v1106, %v1190
    %v1192 = vpop.f32.mrf.mxu0
    %v1193 = vpop.f32.mrf.mxu0
    %v1194 = vadd.f32 %v1106, %v1193
    %v1195 = vpop.f32.mrf.mxu0
    %1196 = vmatprep.mubr.bf16.mxu0 0
    %1197 = vmatmul.mubr.bf16.gmra.mxu0 %v1087
    %v1198 = vpop.f32.mrf.mxu0
    %v1199 = vadd.f32 %v1106, %v1198
    %v1200 = vpop.f32.mrf.mxu0
    %v1201 = vpop.f32.mrf.mxu0
    %v1202 = vadd.f32 %v1106, %v1201
    %v1203 = vpop.f32.mrf.mxu0
    %1204 = vmatprep.mubr.bf16.mxu0 0
    %1205 = vmatmul.mubr.bf16.gmra.mxu0 %v1088
    %v1206 = vpop.f32.mrf.mxu0
    %v1207 = vadd.f32 %v1106, %v1206
    %v1208 = vpop.f32.mrf.mxu0
    %v1209 = vpop.f32.mrf.mxu0
    %v1210 = vadd.f32 %v1106, %v1209
    %v1211 = vpop.f32.mrf.mxu0
    %1212 = vmatprep.mubr.bf16.mxu0 0
    %1213 = vmatmul.mubr.bf16.gmra.mxu0 %v1089
    %v1214 = vpop.f32.mrf.mxu0
    %v1215 = vadd.f32 %v1106, %v1214
    %v1216 = vpop.f32.mrf.mxu0
    %v1217 = vpop.f32.mrf.mxu0
    %v1218 = vadd.f32 %v1106, %v1217
    %v1219 = vpop.f32.mrf.mxu0
    %1220 = vmatprep.mubr.bf16.mxu0 0
    %1221 = vmatmul.mubr.bf16.gmra.mxu0 %v1090
    %v1222 = vpop.f32.mrf.mxu0
    %v1223 = vadd.f32 %v1106, %v1222
    %v1224 = vpop.f32.mrf.mxu0
    %v1225 = vpop.f32.mrf.mxu0
    %v1226 = vadd.f32 %v1106, %v1225
    %v1227 = vpop.f32.mrf.mxu0
    %1228 = vmatprep.mubr.bf16.mxu0 0
    %1229 = vmatmul.mubr.bf16.gmra.mxu0 %v1091
    %v1230 = vpop.f32.mrf.mxu0
    %v1231 = vadd.f32 %v1106, %v1230
    %v1232 = vpop.f32.mrf.mxu0
    %v1233 = vpop.f32.mrf.mxu0
    %v1234 = vadd.f32 %v1106, %v1233
    %v1235 = vpop.f32.mrf.mxu0
    %1236 = vmatprep.mubr.bf16.mxu0 0
    %1237 = vmatmul.mubr.bf16.gmra.mxu0 %v1092
    %v1238 = vpop.f32.mrf.mxu0
    %v1239 = vadd.f32 %v1106, %v1238
    %v1240 = vpop.f32.mrf.mxu0
    %v1241 = vpop.f32.mrf.mxu0
    %v1242 = vadd.f32 %v1106, %v1241
    %v1243 = vpop.f32.mrf.mxu0
    %1244 = vmatprep.mubr.bf16.mxu0 0
    %1245 = vmatmul.mubr.bf16.gmra.mxu0 %v1093
    %v1246 = vpop.f32.mrf.mxu0
    %v1247 = vadd.f32 %v1106, %v1246
    %v1248 = vpop.f32.mrf.mxu0
    %v1249 = vpop.f32.mrf.mxu0
    %v1250 = vadd.f32 %v1106, %v1249
    %v1251 = vpop.f32.mrf.mxu0
    %1252 = vmatprep.mubr.bf16.mxu0 0
    %1253 = vmatmul.mubr.bf16.gmra.mxu0 %v1094
    %v1254 = vpop.f32.mrf.mxu0
    %v1255 = vadd.f32 %v1106, %v1254
    %v1256 = vpop.f32.mrf.mxu0
    %v1257 = vpop.f32.mrf.mxu0
    %v1258 = vadd.f32 %v1106, %v1257
    %v1259 = vpop.f32.mrf.mxu0
    %1260 = vmatprep.mubr.bf16.mxu0 0
    %1261 = vmatmul.mubr.bf16.gmra.mxu0 %v1095
    %v1262 = vpop.f32.mrf.mxu0
    %v1263 = vadd.f32 %v1106, %v1262
    %v1264 = vpop.f32.mrf.mxu0
    %v1265 = vpop.f32.mrf.mxu0
    %v1266 = vadd.f32 %v1106, %v1265
    %v1267 = vpop.f32.mrf.mxu0
    %1268 = vmatprep.mubr.bf16.mxu0 0
    %1269 = vmatmul.mubr.bf16.gmra.mxu0 %v1096
    %v1270 = vpop.f32.mrf.mxu0
    %v1271 = vadd.f32 %v1106, %v1270
    %v1272 = vpop.f32.mrf.mxu0
    %v1273 = vpop.f32.mrf.mxu0
    %v1274 = vadd.f32 %v1106, %v1273
    %v1275 = vpop.f32.mrf.mxu0
    %1276 = vmatprep.mubr.bf16.mxu0 0
    %1277 = vmatmul.mubr.bf16.gmra.mxu0 %v1097
    %v1278 = vpop.f32.mrf.mxu0
    %v1279 = vadd.f32 %v1106, %v1278
    %v1280 = vpop.f32.mrf.mxu0
    %v1281 = vpop.f32.mrf.mxu0
    %v1282 = vadd.f32 %v1106, %v1281
    %v1283 = vpop.f32.mrf.mxu0
    %1284 = vmatprep.mubr.bf16.mxu0 0
    %1285 = vmatmul.mubr.bf16.gmra.mxu0 %v1098
    %v1286 = vpop.f32.mrf.mxu0
    %v1287 = vadd.f32 %v1106, %v1286
    %v1288 = vpop.f32.mrf.mxu0
    %v1289 = vpop.f32.mrf.mxu0
    %v1290 = vadd.f32 %v1106, %v1289
    %v1291 = vpop.f32.mrf.mxu0
    %1292 = vmatprep.mubr.bf16.mxu0 0
    %1293 = vmatmul.mubr.bf16.gmra.mxu0 %v1099
    %v1294 = vpop.f32.mrf.mxu0
    %v1295 = vadd.f32 %v1106, %v1294
    %v1296 = vpop.f32.mrf.mxu0
    %v1297 = vpop.f32.mrf.mxu0
    %v1298 = vadd.f32 %v1106, %v1297
    %v1299 = vpop.f32.mrf.mxu0
    %1300 = vmatprep.mubr.bf16.mxu0 0
    %1301 = vmatmul.mubr.bf16.gmra.mxu0 %v1100
    %v1302 = vpop.f32.mrf.mxu0
    %v1303 = vadd.f32 %v1106, %v1302
    %v1304 = vpop.f32.mrf.mxu0
    %v1305 = vpop.f32.mrf.mxu0
    %v1306 = vadd.f32 %v1106, %v1305
    %v1307 = vpop.f32.mrf.mxu0
    %1308 = vmatprep.mubr.bf16.mxu0 0
    %1309 = vmatmul.mubr.bf16.gmra.mxu0 %v1101
    %v1310 = vpop.f32.mrf.mxu0
    %v1311 = vadd.f32 %v1106, %v1310
    %v1312 = vpop.f32.mrf.mxu0
    %v1313 = vpop.f32.mrf.mxu0
    %v1314 = vadd.f32 %v1106, %v1313
    %v1315 = vpop.f32.mrf.mxu0
    %1316 = vdwg.mxu0
    %v1317 = vmul.f32 %v1191, 0.2
    %v1318 = vmul.f32 %v1194, 0.2
    %v1319 = vmul.f32 %v1199, 0.2
    %v1320 = vmul.f32 %v1202, 0.2
    %v1321 = vmul.f32 %v1207, 0.2
    %v1322 = vmul.f32 %v1210, 0.2
    %v1323 = vmul.f32 %v1215, 0.2
    %v1324 = vmul.f32 %v1218, 0.2
    %v1325 = vmul.f32 %v1223, 0.2
    %v1326 = vmul.f32 %v1226, 0.2
    %v1327 = vmul.f32 %v1231, 0.2
    %v1328 = vmul.f32 %v1234, 0.2
    %v1329 = vmul.f32 %v1239, 0.2
    %v1330 = vmul.f32 %v1242, 0.2
    %v1331 = vmul.f32 %v1247, 0.2
    %v1332 = vmul.f32 %v1250, 0.2
    %v1333 = vmul.f32 %v1255, 0.2
    %v1334 = vmul.f32 %v1258, 0.2
    %v1335 = vmul.f32 %v1263, 0.2
    %v1336 = vmul.f32 %v1266, 0.2
    %v1337 = vmul.f32 %v1271, 0.2
    %v1338 = vmul.f32 %v1274, 0.2
    %v1339 = vmul.f32 %v1279, 0.2
    %v1340 = vmul.f32 %v1282, 0.2
    %v1341 = vmul.f32 %v1287, 0.2
    %v1342 = vmul.f32 %v1290, 0.2
    %v1343 = vmul.f32 %v1295, 0.2
    %v1344 = vmul.f32 %v1298, 0.2
    %v1345 = vmul.f32 %v1303, 0.2
    %v1346 = vmul.f32 %v1306, 0.2
    %v1347 = vmul.f32 %v1311, 0.2
    %v1348 = vmul.f32 %v1314, 0.2
    %v1349 = vmax.f32 %v1191, %v1317
    %v1350 = vmax.f32 %v1194, %v1318
    %v1351 = vmax.f32 %v1199, %v1319
    %v1352 = vmax.f32 %v1202, %v1320
    %v1353 = vmax.f32 %v1207, %v1321
    %v1354 = vmax.f32 %v1210, %v1322
    %v1355 = vmax.f32 %v1215, %v1323
    %v1356 = vmax.f32 %v1218, %v1324
    %v1357 = vmax.f32 %v1223, %v1325
    %v1358 = vmax.f32 %v1226, %v1326
    %v1359 = vmax.f32 %v1231, %v1327
    %v1360 = vmax.f32 %v1234, %v1328
    %v1361 = vmax.f32 %v1239, %v1329
    %v1362 = vmax.f32 %v1242, %v1330
    %v1363 = vmax.f32 %v1247, %v1331
    %v1364 = vmax.f32 %v1250, %v1332
    %v1365 = vmax.f32 %v1255, %v1333
    %v1366 = vmax.f32 %v1258, %v1334
    %v1367 = vmax.f32 %v1263, %v1335
    %v1368 = vmax.f32 %v1266, %v1336
    %v1369 = vmax.f32 %v1271, %v1337
    %v1370 = vmax.f32 %v1274, %v1338
    %v1371 = vmax.f32 %v1279, %v1339
    %v1372 = vmax.f32 %v1282, %v1340
    %v1373 = vmax.f32 %v1287, %v1341
    %v1374 = vmax.f32 %v1290, %v1342
    %v1375 = vmax.f32 %v1295, %v1343
    %v1376 = vmax.f32 %v1298, %v1344
    %v1377 = vmax.f32 %v1303, %v1345
    %v1378 = vmax.f32 %v1306, %v1346
    %v1379 = vmax.f32 %v1311, %v1347
    %v1380 = vmax.f32 %v1314, %v1348
    %v1381 = vpack.c.bf16 %v1350, %v1349
    %v1382 = vpack.c.bf16 %v1352, %v1351
    %v1383 = vpack.c.bf16 %v1354, %v1353
    %v1384 = vpack.c.bf16 %v1356, %v1355
    %v1385 = vpack.c.bf16 %v1358, %v1357
    %v1386 = vpack.c.bf16 %v1360, %v1359
    %v1387 = vpack.c.bf16 %v1362, %v1361
    %v1388 = vpack.c.bf16 %v1364, %v1363
    %v1389 = vpack.c.bf16 %v1366, %v1365
    %v1390 = vpack.c.bf16 %v1368, %v1367
    %v1391 = vpack.c.bf16 %v1370, %v1369
    %v1392 = vpack.c.bf16 %v1372, %v1371
    %v1393 = vpack.c.bf16 %v1374, %v1373
    %v1394 = vpack.c.bf16 %v1376, %v1375
    %v1395 = vpack.c.bf16 %v1378, %v1377
    %v1396 = vpack.c.bf16 %v1380, %v1379
    %v1397 = vld [vmem:[#allocation10] sm:$0xf]
    %v1398 = vld [vmem:[#allocation10 + $0x4] sm:$0xf]
    %v1399 = vld [vmem:[#allocation10 + $0x8] sm:$0xf]
    %v1400 = vld [vmem:[#allocation10 + $0xc] sm:$0xf]
    %v1401 = vld [vmem:[#allocation10 + $0x10] sm:$0xf]
    %v1402 = vld [vmem:[#allocation10 + $0x14] sm:$0xf]
    %v1403 = vld [vmem:[#allocation10 + $0x18] sm:$0xf]
    %v1404 = vld [vmem:[#allocation10 + $0x1c] sm:$0xf]
    %v1405 = vld [vmem:[#allocation10 + $0x20] sm:$0xf]
    %v1406 = vld [vmem:[#allocation10 + $0x24] sm:$0xf]
    %v1407 = vld [vmem:[#allocation10 + $0x28] sm:$0xf]
    %v1408 = vld [vmem:[#allocation10 + $0x2c] sm:$0xf]
    %v1409 = vld [vmem:[#allocation10 + $0x30] sm:$0xf]
    %v1410 = vld [vmem:[#allocation10 + $0x34] sm:$0xf]
    %v1411 = vld [vmem:[#allocation10 + $0x38] sm:$0xf]
    %v1412 = vld [vmem:[#allocation10 + $0x3c] sm:$0xf]
    %v1413 = vld [vmem:[%s7] sm:$0x1]
    %1414 = vmatprep.subr.bf16.mxu0 0
    %1415 = vmatpush1.bf16.msra.mxu0 %v1388
    %1416 = vmatprep.subr.bf16.mxu0 0
    %1417 = vmatpush1.bf16.msra.mxu0 %v1387
    %1418 = vmatprep.subr.bf16.mxu0 0
    %1419 = vmatpush1.bf16.msra.mxu0 %v1386
    %1420 = vmatprep.subr.bf16.mxu0 0
    %1421 = vmatpush1.bf16.msra.mxu0 %v1385
    %1422 = vmatprep.subr.bf16.mxu0 0
    %1423 = vmatpush1.bf16.msra.mxu0 %v1384
    %1424 = vmatprep.subr.bf16.mxu0 0
    %1425 = vmatpush1.bf16.msra.mxu0 %v1383
    %1426 = vmatprep.subr.bf16.mxu0 0
    %1427 = vmatpush1.bf16.msra.mxu0 %v1382
    %1428 = vmatprep.subr.bf16.mxu0 0
    %1429 = vmatpush1.bf16.msra.mxu0 %v1381
    %1430 = vmatprep.subr.bf16.mxu0 0
    %1431 = vmatpush2.bf16.msra.mxu0 %v1396
    %1432 = vmatprep.subr.bf16.mxu0 0
    %1433 = vmatpush2.bf16.msra.mxu0 %v1395
    %1434 = vmatprep.subr.bf16.mxu0 0
    %1435 = vmatpush2.bf16.msra.mxu0 %v1394
    %1436 = vmatprep.subr.bf16.mxu0 0
    %1437 = vmatpush2.bf16.msra.mxu0 %v1393
    %1438 = vmatprep.subr.bf16.mxu0 0
    %1439 = vmatpush2.bf16.msra.mxu0 %v1392
    %1440 = vmatprep.subr.bf16.mxu0 0
    %1441 = vmatpush2.bf16.msra.mxu0 %v1391
    %1442 = vmatprep.subr.bf16.mxu0 0
    %1443 = vmatpush2.bf16.msra.mxu0 %v1390
    %1444 = vmatprep.subr.bf16.mxu0 0
    %1445 = vmatpush2.bf16.msra.mxu0 %v1389
    %1446 = vmatprep.mubr.bf16.mxu0 %v277
    %1447 = vmatmul.mubr.bf16.gmra.mxu0 %v276
    %v1448 = vpop.f32.mrf.mxu0
    %v1449 = vadd.f32 0.0, %v1448
    %v1450 = vpop.f32.mrf.mxu0
    %v1451 = vpop.f32.mrf.mxu0
    %v1452 = vadd.f32 0.0, %v1451
    %v1453 = vpop.f32.mrf.mxu0
    %1454 = vmatprep.mubr.bf16.mxu0 %v279
    %1455 = vmatmul.mubr.bf16.gmra.mxu0 %v278
    %v1456 = vpop.f32.mrf.mxu0
    %v1457 = vadd.f32 0.0, %v1456
    %v1458 = vpop.f32.mrf.mxu0
    %v1459 = vpop.f32.mrf.mxu0
    %v1460 = vadd.f32 0.0, %v1459
    %v1461 = vpop.f32.mrf.mxu0
    %1462 = vmatprep.mubr.bf16.mxu0 %v281
    %1463 = vmatmul.mubr.bf16.gmra.mxu0 %v280
    %v1464 = vpop.f32.mrf.mxu0
    %v1465 = vadd.f32 0.0, %v1464
    %v1466 = vpop.f32.mrf.mxu0
    %v1467 = vpop.f32.mrf.mxu0
    %v1468 = vadd.f32 0.0, %v1467
    %v1469 = vpop.f32.mrf.mxu0
    %1470 = vmatprep.mubr.bf16.mxu0 %v283
    %1471 = vmatmul.mubr.bf16.gmra.mxu0 %v282
    %v1472 = vpop.f32.mrf.mxu0
    %v1473 = vadd.f32 0.0, %v1472
    %v1474 = vpop.f32.mrf.mxu0
    %v1475 = vpop.f32.mrf.mxu0
    %v1476 = vadd.f32 0.0, %v1475
    %v1477 = vpop.f32.mrf.mxu0
    %1478 = vmatprep.mubr.bf16.mxu0 %v285
    %1479 = vmatmul.mubr.bf16.gmra.mxu0 %v284
    %v1480 = vpop.f32.mrf.mxu0
    %v1481 = vadd.f32 0.0, %v1480
    %v1482 = vpop.f32.mrf.mxu0
    %v1483 = vpop.f32.mrf.mxu0
    %v1484 = vadd.f32 0.0, %v1483
    %v1485 = vpop.f32.mrf.mxu0
    %1486 = vmatprep.mubr.bf16.mxu0 %v287
    %1487 = vmatmul.mubr.bf16.gmra.mxu0 %v286
    %v1488 = vpop.f32.mrf.mxu0
    %v1489 = vadd.f32 0.0, %v1488
    %v1490 = vpop.f32.mrf.mxu0
    %v1491 = vpop.f32.mrf.mxu0
    %v1492 = vadd.f32 0.0, %v1491
    %v1493 = vpop.f32.mrf.mxu0
    %1494 = vmatprep.mubr.bf16.mxu0 %v289
    %1495 = vmatmul.mubr.bf16.gmra.mxu0 %v288
    %v1496 = vpop.f32.mrf.mxu0
    %v1497 = vadd.f32 0.0, %v1496
    %v1498 = vpop.f32.mrf.mxu0
    %v1499 = vpop.f32.mrf.mxu0
    %v1500 = vadd.f32 0.0, %v1499
    %v1501 = vpop.f32.mrf.mxu0
    %1502 = vmatprep.mubr.bf16.mxu0 %v291
    %1503 = vmatmul.mubr.bf16.gmra.mxu0 %v290
    %v1504 = vpop.f32.mrf.mxu0
    %v1505 = vadd.f32 0.0, %v1504
    %v1506 = vpop.f32.mrf.mxu0
    %v1507 = vpop.f32.mrf.mxu0
    %v1508 = vadd.f32 0.0, %v1507
    %v1509 = vpop.f32.mrf.mxu0
    %1510 = vmatprep.mubr.bf16.mxu0 %v293
    %1511 = vmatmul.mubr.bf16.gmra.mxu0 %v292
    %v1512 = vpop.f32.mrf.mxu0
    %v1513 = vadd.f32 0.0, %v1512
    %v1514 = vpop.f32.mrf.mxu0
    %v1515 = vpop.f32.mrf.mxu0
    %v1516 = vadd.f32 0.0, %v1515
    %v1517 = vpop.f32.mrf.mxu0
    %1518 = vmatprep.mubr.bf16.mxu0 %v295
    %1519 = vmatmul.mubr.bf16.gmra.mxu0 %v294
    %v1520 = vpop.f32.mrf.mxu0
    %v1521 = vadd.f32 0.0, %v1520
    %v1522 = vpop.f32.mrf.mxu0
    %v1523 = vpop.f32.mrf.mxu0
    %v1524 = vadd.f32 0.0, %v1523
    %v1525 = vpop.f32.mrf.mxu0
    %1526 = vmatprep.mubr.bf16.mxu0 %v297
    %1527 = vmatmul.mubr.bf16.gmra.mxu0 %v296
    %v1528 = vpop.f32.mrf.mxu0
    %v1529 = vadd.f32 0.0, %v1528
    %v1530 = vpop.f32.mrf.mxu0
    %v1531 = vpop.f32.mrf.mxu0
    %v1532 = vadd.f32 0.0, %v1531
    %v1533 = vpop.f32.mrf.mxu0
    %1534 = vmatprep.mubr.bf16.mxu0 %v299
    %1535 = vmatmul.mubr.bf16.gmra.mxu0 %v298
    %v1536 = vpop.f32.mrf.mxu0
    %v1537 = vadd.f32 0.0, %v1536
    %v1538 = vpop.f32.mrf.mxu0
    %v1539 = vpop.f32.mrf.mxu0
    %v1540 = vadd.f32 0.0, %v1539
    %v1541 = vpop.f32.mrf.mxu0
    %1542 = vmatprep.mubr.bf16.mxu0 %v301
    %1543 = vmatmul.mubr.bf16.gmra.mxu0 %v300
    %v1544 = vpop.f32.mrf.mxu0
    %v1545 = vadd.f32 0.0, %v1544
    %v1546 = vpop.f32.mrf.mxu0
    %v1547 = vpop.f32.mrf.mxu0
    %v1548 = vadd.f32 0.0, %v1547
    %v1549 = vpop.f32.mrf.mxu0
    %1550 = vmatprep.mubr.bf16.mxu0 %v303
    %1551 = vmatmul.mubr.bf16.gmra.mxu0 %v302
    %v1552 = vpop.f32.mrf.mxu0
    %v1553 = vadd.f32 0.0, %v1552
    %v1554 = vpop.f32.mrf.mxu0
    %v1555 = vpop.f32.mrf.mxu0
    %v1556 = vadd.f32 0.0, %v1555
    %v1557 = vpop.f32.mrf.mxu0
    %1558 = vmatprep.mubr.bf16.mxu0 %v305
    %1559 = vmatmul.mubr.bf16.gmra.mxu0 %v304
    %v1560 = vpop.f32.mrf.mxu0
    %v1561 = vadd.f32 0.0, %v1560
    %v1562 = vpop.f32.mrf.mxu0
    %v1563 = vpop.f32.mrf.mxu0
    %v1564 = vadd.f32 0.0, %v1563
    %v1565 = vpop.f32.mrf.mxu0
    %1566 = vmatprep.mubr.bf16.mxu0 %v307
    %1567 = vmatmul.mubr.bf16.gmra.mxu0 %v306
    %v1568 = vpop.f32.mrf.mxu0
    %v1569 = vadd.f32 0.0, %v1568
    %v1570 = vpop.f32.mrf.mxu0
    %v1571 = vpop.f32.mrf.mxu0
    %v1572 = vadd.f32 0.0, %v1571
    %v1573 = vpop.f32.mrf.mxu0
    %1574 = vdwg.mxu0
    %v1575 = vpack.c.bf16 %v1452, %v1449
    %v1576 = vpack.c.bf16 %v1460, %v1457
    %v1577 = vpack.c.bf16 %v1468, %v1465
    %v1578 = vpack.c.bf16 %v1476, %v1473
    %v1579 = vpack.c.bf16 %v1484, %v1481
    %v1580 = vpack.c.bf16 %v1492, %v1489
    %v1581 = vpack.c.bf16 %v1500, %v1497
    %v1582 = vpack.c.bf16 %v1508, %v1505
    %v1583 = vpack.c.bf16 %v1516, %v1513
    %v1584 = vpack.c.bf16 %v1524, %v1521
    %v1585 = vpack.c.bf16 %v1532, %v1529
    %v1586 = vpack.c.bf16 %v1540, %v1537
    %v1587 = vpack.c.bf16 %v1548, %v1545
    %v1588 = vpack.c.bf16 %v1556, %v1553
    %v1589 = vpack.c.bf16 %v1564, %v1561
    %v1590 = vpack.c.bf16 %v1572, %v1569
    %v1592 = vlaneseq
    %v1593 = vshrl.u32 %v1592, 7
    %v1594 = vsub.s32 0, %v1593
    %v1595 = vrot.slane %v1413, %v1594
    %v1613 = vunpack.c.l.b16 %v1397
    %v1614 = vunpack.c.l.b16 %v1398
    %v1615 = vunpack.c.l.b16 %v1399
    %v1616 = vunpack.c.l.b16 %v1400
    %v1617 = vunpack.c.l.b16 %v1401
    %v1618 = vunpack.c.l.b16 %v1402
    %v1619 = vunpack.c.l.b16 %v1403
    %v1620 = vunpack.c.l.b16 %v1404
    %v1621 = vunpack.c.l.b16 %v1405
    %v1622 = vunpack.c.l.b16 %v1406
    %v1623 = vunpack.c.l.b16 %v1407
    %v1624 = vunpack.c.l.b16 %v1408
    %v1625 = vunpack.c.l.b16 %v1409
    %v1626 = vunpack.c.l.b16 %v1410
    %v1627 = vunpack.c.l.b16 %v1411
    %v1628 = vunpack.c.l.b16 %v1412
    %v1629 = vpack.c.b16 %v1614, %v1613
    %v1630 = vpack.c.b16 %v1616, %v1615
    %v1631 = vpack.c.b16 %v1618, %v1617
    %v1632 = vpack.c.b16 %v1620, %v1619
    %v1633 = vpack.c.b16 %v1622, %v1621
    %v1634 = vpack.c.b16 %v1624, %v1623
    %v1635 = vpack.c.b16 %v1626, %v1625
    %v1636 = vpack.c.b16 %v1628, %v1627
    %1645 = vmatprep.subr.bf16.mxu0 0
    %1646 = vmatpush1.bf16.msra.mxu0 %v1636
    %1647 = vmatprep.subr.bf16.mxu0 0
    %1648 = vmatpush1.bf16.msra.mxu0 %v1635
    %1649 = vmatprep.subr.bf16.mxu0 0
    %1650 = vmatpush1.bf16.msra.mxu0 %v1634
    %1651 = vmatprep.subr.bf16.mxu0 0
    %1652 = vmatpush1.bf16.msra.mxu0 %v1633
    %1653 = vmatprep.subr.bf16.mxu0 0
    %1654 = vmatpush1.bf16.msra.mxu0 %v1632
    %1655 = vmatprep.subr.bf16.mxu0 0
    %1656 = vmatpush1.bf16.msra.mxu0 %v1631
    %1657 = vmatprep.subr.bf16.mxu0 0
    %1658 = vmatpush1.bf16.msra.mxu0 %v1630
    %1659 = vmatprep.subr.bf16.mxu0 0
    %1660 = vmatpush1.bf16.msra.mxu0 %v1629
    %1661 = vmatprep.subr.bf16.mxu0 0
    %1662 = vmatpush2.bf16.msra.mxu0 0
    %1663 = vmatprep.subr.bf16.mxu0 0
    %1664 = vmatpush2.bf16.msra.mxu0 0
    %1665 = vmatprep.subr.bf16.mxu0 0
    %1666 = vmatpush2.bf16.msra.mxu0 0
    %1667 = vmatprep.subr.bf16.mxu0 0
    %1668 = vmatpush2.bf16.msra.mxu0 0
    %1669 = vmatprep.subr.bf16.mxu0 0
    %1670 = vmatpush2.bf16.msra.mxu0 0
    %1671 = vmatprep.subr.bf16.mxu0 0
    %1672 = vmatpush2.bf16.msra.mxu0 0
    %1673 = vmatprep.subr.bf16.mxu0 0
    %1674 = vmatpush2.bf16.msra.mxu0 0
    %1675 = vmatprep.subr.bf16.mxu0 0
    %1676 = vmatpush2.bf16.msra.mxu0 0
    %1677 = vmatprep.mubr.bf16.mxu0 0
    %1678 = vmatmul.mubr.bf16.gmra.mxu0 %v1575
    %v1679 = vpop.f32.mrf.mxu0
    %v1680 = vadd.f32 %v1595, %v1679
    %v1681 = vpop.f32.mrf.mxu0
    %v1682 = vpop.f32.mrf.mxu0
    %v1683 = vadd.f32 %v1595, %v1682
    %v1684 = vpop.f32.mrf.mxu0
    %1685 = vmatprep.mubr.bf16.mxu0 0
    %1686 = vmatmul.mubr.bf16.gmra.mxu0 %v1576
    %v1687 = vpop.f32.mrf.mxu0
    %v1688 = vadd.f32 %v1595, %v1687
    %v1689 = vpop.f32.mrf.mxu0
    %v1690 = vpop.f32.mrf.mxu0
    %v1691 = vadd.f32 %v1595, %v1690
    %v1692 = vpop.f32.mrf.mxu0
    %1693 = vmatprep.mubr.bf16.mxu0 0
    %1694 = vmatmul.mubr.bf16.gmra.mxu0 %v1577
    %v1695 = vpop.f32.mrf.mxu0
    %v1696 = vadd.f32 %v1595, %v1695
    %v1697 = vpop.f32.mrf.mxu0
    %v1698 = vpop.f32.mrf.mxu0
    %v1699 = vadd.f32 %v1595, %v1698
    %v1700 = vpop.f32.mrf.mxu0
    %1701 = vmatprep.mubr.bf16.mxu0 0
    %1702 = vmatmul.mubr.bf16.gmra.mxu0 %v1578
    %v1703 = vpop.f32.mrf.mxu0
    %v1704 = vadd.f32 %v1595, %v1703
    %v1705 = vpop.f32.mrf.mxu0
    %v1706 = vpop.f32.mrf.mxu0
    %v1707 = vadd.f32 %v1595, %v1706
    %v1708 = vpop.f32.mrf.mxu0
    %1709 = vmatprep.mubr.bf16.mxu0 0
    %1710 = vmatmul.mubr.bf16.gmra.mxu0 %v1579
    %v1711 = vpop.f32.mrf.mxu0
    %v1712 = vadd.f32 %v1595, %v1711
    %v1713 = vpop.f32.mrf.mxu0
    %v1714 = vpop.f32.mrf.mxu0
    %v1715 = vadd.f32 %v1595, %v1714
    %v1716 = vpop.f32.mrf.mxu0
    %1717 = vmatprep.mubr.bf16.mxu0 0
    %1718 = vmatmul.mubr.bf16.gmra.mxu0 %v1580
    %v1719 = vpop.f32.mrf.mxu0
    %v1720 = vadd.f32 %v1595, %v1719
    %v1721 = vpop.f32.mrf.mxu0
    %v1722 = vpop.f32.mrf.mxu0
    %v1723 = vadd.f32 %v1595, %v1722
    %v1724 = vpop.f32.mrf.mxu0
    %1725 = vmatprep.mubr.bf16.mxu0 0
    %1726 = vmatmul.mubr.bf16.gmra.mxu0 %v1581
    %v1727 = vpop.f32.mrf.mxu0
    %v1728 = vadd.f32 %v1595, %v1727
    %v1729 = vpop.f32.mrf.mxu0
    %v1730 = vpop.f32.mrf.mxu0
    %v1731 = vadd.f32 %v1595, %v1730
    %v1732 = vpop.f32.mrf.mxu0
    %1733 = vmatprep.mubr.bf16.mxu0 0
    %1734 = vmatmul.mubr.bf16.gmra.mxu0 %v1582
    %v1735 = vpop.f32.mrf.mxu0
    %v1736 = vadd.f32 %v1595, %v1735
    %v1737 = vpop.f32.mrf.mxu0
    %v1738 = vpop.f32.mrf.mxu0
    %v1739 = vadd.f32 %v1595, %v1738
    %v1740 = vpop.f32.mrf.mxu0
    %1741 = vmatprep.mubr.bf16.mxu0 0
    %1742 = vmatmul.mubr.bf16.gmra.mxu0 %v1583
    %v1743 = vpop.f32.mrf.mxu0
    %v1744 = vadd.f32 %v1595, %v1743
    %v1745 = vpop.f32.mrf.mxu0
    %v1746 = vpop.f32.mrf.mxu0
    %v1747 = vadd.f32 %v1595, %v1746
    %v1748 = vpop.f32.mrf.mxu0
    %1749 = vmatprep.mubr.bf16.mxu0 0
    %1750 = vmatmul.mubr.bf16.gmra.mxu0 %v1584
    %v1751 = vpop.f32.mrf.mxu0
    %v1752 = vadd.f32 %v1595, %v1751
    %v1753 = vpop.f32.mrf.mxu0
    %v1754 = vpop.f32.mrf.mxu0
    %v1755 = vadd.f32 %v1595, %v1754
    %v1756 = vpop.f32.mrf.mxu0
    %1757 = vmatprep.mubr.bf16.mxu0 0
    %1758 = vmatmul.mubr.bf16.gmra.mxu0 %v1585
    %v1759 = vpop.f32.mrf.mxu0
    %v1760 = vadd.f32 %v1595, %v1759
    %v1761 = vpop.f32.mrf.mxu0
    %v1762 = vpop.f32.mrf.mxu0
    %v1763 = vadd.f32 %v1595, %v1762
    %v1764 = vpop.f32.mrf.mxu0
    %1765 = vmatprep.mubr.bf16.mxu0 0
    %1766 = vmatmul.mubr.bf16.gmra.mxu0 %v1586
    %v1767 = vpop.f32.mrf.mxu0
    %v1768 = vadd.f32 %v1595, %v1767
    %v1769 = vpop.f32.mrf.mxu0
    %v1770 = vpop.f32.mrf.mxu0
    %v1771 = vadd.f32 %v1595, %v1770
    %v1772 = vpop.f32.mrf.mxu0
    %1773 = vmatprep.mubr.bf16.mxu0 0
    %1774 = vmatmul.mubr.bf16.gmra.mxu0 %v1587
    %v1775 = vpop.f32.mrf.mxu0
    %v1776 = vadd.f32 %v1595, %v1775
    %v1777 = vpop.f32.mrf.mxu0
    %v1778 = vpop.f32.mrf.mxu0
    %v1779 = vadd.f32 %v1595, %v1778
    %v1780 = vpop.f32.mrf.mxu0
    %1781 = vmatprep.mubr.bf16.mxu0 0
    %1782 = vmatmul.mubr.bf16.gmra.mxu0 %v1588
    %v1783 = vpop.f32.mrf.mxu0
    %v1784 = vadd.f32 %v1595, %v1783
    %v1785 = vpop.f32.mrf.mxu0
    %v1786 = vpop.f32.mrf.mxu0
    %v1787 = vadd.f32 %v1595, %v1786
    %v1788 = vpop.f32.mrf.mxu0
    %1789 = vmatprep.mubr.bf16.mxu0 0
    %1790 = vmatmul.mubr.bf16.gmra.mxu0 %v1589
    %v1791 = vpop.f32.mrf.mxu0
    %v1792 = vadd.f32 %v1595, %v1791
    %v1793 = vpop.f32.mrf.mxu0
    %v1794 = vpop.f32.mrf.mxu0
    %v1795 = vadd.f32 %v1595, %v1794
    %v1796 = vpop.f32.mrf.mxu0
    %1797 = vmatprep.mubr.bf16.mxu0 0
    %1798 = vmatmul.mubr.bf16.gmra.mxu0 %v1590
    %v1799 = vpop.f32.mrf.mxu0
    %v1800 = vadd.f32 %v1595, %v1799
    %v1801 = vpop.f32.mrf.mxu0
    %v1802 = vpop.f32.mrf.mxu0
    %v1803 = vadd.f32 %v1595, %v1802
    %v1804 = vpop.f32.mrf.mxu0
    %1805 = vdwg.mxu0
    %v1806 = vmul.f32 %v1680, %v1680
    %v1807 = vmul.f32 %v1683, %v1683
    %v1808 = vmul.f32 %v1688, %v1688
    %v1809 = vmul.f32 %v1691, %v1691
    %v1810 = vmul.f32 %v1696, %v1696
    %v1811 = vmul.f32 %v1699, %v1699
    %v1812 = vmul.f32 %v1704, %v1704
    %v1813 = vmul.f32 %v1707, %v1707
    %v1814 = vmul.f32 %v1712, %v1712
    %v1815 = vmul.f32 %v1715, %v1715
    %v1816 = vmul.f32 %v1720, %v1720
    %v1817 = vmul.f32 %v1723, %v1723
    %v1818 = vmul.f32 %v1728, %v1728
    %v1819 = vmul.f32 %v1731, %v1731
    %v1820 = vmul.f32 %v1736, %v1736
    %v1821 = vmul.f32 %v1739, %v1739
    %v1822 = vmul.f32 %v1744, %v1744
    %v1823 = vmul.f32 %v1747, %v1747
    %v1824 = vmul.f32 %v1752, %v1752
    %v1825 = vmul.f32 %v1755, %v1755
    %v1826 = vmul.f32 %v1760, %v1760
    %v1827 = vmul.f32 %v1763, %v1763
    %v1828 = vmul.f32 %v1768, %v1768
    %v1829 = vmul.f32 %v1771, %v1771
    %v1830 = vmul.f32 %v1776, %v1776
    %v1831 = vmul.f32 %v1779, %v1779
    %v1832 = vmul.f32 %v1784, %v1784
    %v1833 = vmul.f32 %v1787, %v1787
    %v1834 = vmul.f32 %v1792, %v1792
    %v1835 = vmul.f32 %v1795, %v1795
    %v1836 = vmul.f32 %v1800, %v1800
    %v1837 = vmul.f32 %v1803, %v1803
    %1838 = vadd.xlane.f32.xlu0 %v1806
    %v1839 = vpop.xlane.xlu0 %1838
    %1840 = vadd.xlane.f32.xlu0 %v1807
    %v1841 = vpop.xlane.xlu0 %1840
    %1842 = vadd.xlane.f32.xlu0 %v1808
    %v1843 = vpop.xlane.xlu0 %1842
    %1844 = vadd.xlane.f32.xlu0 %v1809
    %v1845 = vpop.xlane.xlu0 %1844
    %1846 = vadd.xlane.f32.xlu0 %v1810
    %v1847 = vpop.xlane.xlu0 %1846
    %1848 = vadd.xlane.f32.xlu0 %v1811
    %v1849 = vpop.xlane.xlu0 %1848
    %1850 = vadd.xlane.f32.xlu0 %v1812
    %v1851 = vpop.xlane.xlu0 %1850
    %1852 = vadd.xlane.f32.xlu0 %v1813
    %v1853 = vpop.xlane.xlu0 %1852
    %1854 = vadd.xlane.f32.xlu0 %v1814
    %v1855 = vpop.xlane.xlu0 %1854
    %1856 = vadd.xlane.f32.xlu0 %v1815
    %v1857 = vpop.xlane.xlu0 %1856
    %1858 = vadd.xlane.f32.xlu0 %v1816
    %v1859 = vpop.xlane.xlu0 %1858
    %1860 = vadd.xlane.f32.xlu0 %v1817
    %v1861 = vpop.xlane.xlu0 %1860
    %1862 = vadd.xlane.f32.xlu0 %v1818
    %v1863 = vpop.xlane.xlu0 %1862
    %1864 = vadd.xlane.f32.xlu0 %v1819
    %v1865 = vpop.xlane.xlu0 %1864
    %1866 = vadd.xlane.f32.xlu0 %v1820
    %v1867 = vpop.xlane.xlu0 %1866
    %1868 = vadd.xlane.f32.xlu0 %v1821
    %v1869 = vpop.xlane.xlu0 %1868
    %1870 = vadd.xlane.f32.xlu0 %v1822
    %v1871 = vpop.xlane.xlu0 %1870
    %1872 = vadd.xlane.f32.xlu0 %v1823
    %v1873 = vpop.xlane.xlu0 %1872
    %1874 = vadd.xlane.f32.xlu0 %v1824
    %v1875 = vpop.xlane.xlu0 %1874
    %1876 = vadd.xlane.f32.xlu0 %v1825
    %v1877 = vpop.xlane.xlu0 %1876
    %1878 = vadd.xlane.f32.xlu0 %v1826
    %v1879 = vpop.xlane.xlu0 %1878
    %1880 = vadd.xlane.f32.xlu0 %v1827
    %v1881 = vpop.xlane.xlu0 %1880
    %1882 = vadd.xlane.f32.xlu0 %v1828
    %v1883 = vpop.xlane.xlu0 %1882
    %1884 = vadd.xlane.f32.xlu0 %v1829
    %v1885 = vpop.xlane.xlu0 %1884
    %1886 = vadd.xlane.f32.xlu0 %v1830
    %v1887 = vpop.xlane.xlu0 %1886
    %1888 = vadd.xlane.f32.xlu0 %v1831
    %v1889 = vpop.xlane.xlu0 %1888
    %1890 = vadd.xlane.f32.xlu0 %v1832
    %v1891 = vpop.xlane.xlu0 %1890
    %1892 = vadd.xlane.f32.xlu0 %v1833
    %v1893 = vpop.xlane.xlu0 %1892
    %1894 = vadd.xlane.f32.xlu0 %v1834
    %v1895 = vpop.xlane.xlu0 %1894
    %1896 = vadd.xlane.f32.xlu0 %v1835
    %v1897 = vpop.xlane.xlu0 %1896
    %1898 = vadd.xlane.f32.xlu0 %v1836
    %v1899 = vpop.xlane.xlu0 %1898
    %1900 = vadd.xlane.f32.xlu0 %v1837
    %v1901 = vpop.xlane.xlu0 %1900
    %v1902 = vmax.f32 %v1839, 1e-24
    %v1903 = vmax.f32 %v1841, 1e-24
    %v1904 = vmax.f32 %v1843, 1e-24
    %v1905 = vmax.f32 %v1845, 1e-24
    %v1906 = vmax.f32 %v1847, 1e-24
    %v1907 = vmax.f32 %v1849, 1e-24
    %v1908 = vmax.f32 %v1851, 1e-24
    %v1909 = vmax.f32 %v1853, 1e-24
    %v1910 = vmax.f32 %v1855, 1e-24
    %v1911 = vmax.f32 %v1857, 1e-24
    %v1912 = vmax.f32 %v1859, 1e-24
    %v1913 = vmax.f32 %v1861, 1e-24
    %v1914 = vmax.f32 %v1863, 1e-24
    %v1915 = vmax.f32 %v1865, 1e-24
    %v1916 = vmax.f32 %v1867, 1e-24
    %v1917 = vmax.f32 %v1869, 1e-24
    %v1918 = vmax.f32 %v1871, 1e-24
    %v1919 = vmax.f32 %v1873, 1e-24
    %v1920 = vmax.f32 %v1875, 1e-24
    %v1921 = vmax.f32 %v1877, 1e-24
    %v1922 = vmax.f32 %v1879, 1e-24
    %v1923 = vmax.f32 %v1881, 1e-24
    %v1924 = vmax.f32 %v1883, 1e-24
    %v1925 = vmax.f32 %v1885, 1e-24
    %v1926 = vmax.f32 %v1887, 1e-24
    %v1927 = vmax.f32 %v1889, 1e-24
    %v1928 = vmax.f32 %v1891, 1e-24
    %v1929 = vmax.f32 %v1893, 1e-24
    %v1930 = vmax.f32 %v1895, 1e-24
    %v1931 = vmax.f32 %v1897, 1e-24
    %v1932 = vmax.f32 %v1899, 1e-24
    %v1933 = vmax.f32 %v1901, 1e-24
    %v1934 = vrsqrt.pop %v1902
    %v1935 = vrsqrt.pop %v1903
    %v1936 = vrsqrt.pop %v1904
    %v1937 = vrsqrt.pop %v1905
    %v1938 = vrsqrt.pop %v1906
    %v1939 = vrsqrt.pop %v1907
    %v1940 = vrsqrt.pop %v1908
    %v1941 = vrsqrt.pop %v1909
    %v1942 = vrsqrt.pop %v1910
    %v1943 = vrsqrt.pop %v1911
    %v1944 = vrsqrt.pop %v1912
    %v1945 = vrsqrt.pop %v1913
    %v1946 = vrsqrt.pop %v1914
    %v1947 = vrsqrt.pop %v1915
    %v1948 = vrsqrt.pop %v1916
    %v1949 = vrsqrt.pop %v1917
    %v1950 = vrsqrt.pop %v1918
    %v1951 = vrsqrt.pop %v1919
    %v1952 = vrsqrt.pop %v1920
    %v1953 = vrsqrt.pop %v1921
    %v1954 = vrsqrt.pop %v1922
    %v1955 = vrsqrt.pop %v1923
    %v1956 = vrsqrt.pop %v1924
    %v1957 = vrsqrt.pop %v1925
    %v1958 = vrsqrt.pop %v1926
    %v1959 = vrsqrt.pop %v1927
    %v1960 = vrsqrt.pop %v1928
    %v1961 = vrsqrt.pop %v1929
    %v1962 = vrsqrt.pop %v1930
    %v1963 = vrsqrt.pop %v1931
    %v1964 = vrsqrt.pop %v1932
    %v1965 = vrsqrt.pop %v1933
    %v1966 = vmul.f32 %v1680, %v1934
    %v1967 = vmul.f32 %v1683, %v1935
    %v1968 = vmul.f32 %v1688, %v1936
    %v1969 = vmul.f32 %v1691, %v1937
    %v1970 = vmul.f32 %v1696, %v1938
    %v1971 = vmul.f32 %v1699, %v1939
    %v1972 = vmul.f32 %v1704, %v1940
    %v1973 = vmul.f32 %v1707, %v1941
    %v1974 = vmul.f32 %v1712, %v1942
    %v1975 = vmul.f32 %v1715, %v1943
    %v1976 = vmul.f32 %v1720, %v1944
    %v1977 = vmul.f32 %v1723, %v1945
    %v1978 = vmul.f32 %v1728, %v1946
    %v1979 = vmul.f32 %v1731, %v1947
    %v1980 = vmul.f32 %v1736, %v1948
    %v1981 = vmul.f32 %v1739, %v1949
    %v1982 = vmul.f32 %v1744, %v1950
    %v1983 = vmul.f32 %v1747, %v1951
    %v1984 = vmul.f32 %v1752, %v1952
    %v1985 = vmul.f32 %v1755, %v1953
    %v1986 = vmul.f32 %v1760, %v1954
    %v1987 = vmul.f32 %v1763, %v1955
    %v1988 = vmul.f32 %v1768, %v1956
    %v1989 = vmul.f32 %v1771, %v1957
    %v1990 = vmul.f32 %v1776, %v1958
    %v1991 = vmul.f32 %v1779, %v1959
    %v1992 = vmul.f32 %v1784, %v1960
    %v1993 = vmul.f32 %v1787, %v1961
    %v1994 = vmul.f32 %v1792, %v1962
    %v1995 = vmul.f32 %v1795, %v1963
    %v1996 = vmul.f32 %v1800, %v1964
    %v1997 = vmul.f32 %v1803, %v1965
    %1998 = vst [vmem:[#allocation11] sm:$0xff] %v1966
    %1999 = vst [vmem:[#allocation11 + $0x8] sm:$0xff] %v1967
    %2000 = vst [vmem:[#allocation11 + $0x10] sm:$0xff] %v1968
    %2001 = vst [vmem:[#allocation11 + $0x18] sm:$0xff] %v1969
    %2002 = vst [vmem:[#allocation11 + $0x20] sm:$0xff] %v1970
    %2003 = vst [vmem:[#allocation11 + $0x28] sm:$0xff] %v1971
    %2004 = vst [vmem:[#allocation11 + $0x30] sm:$0xff] %v1972
    %2005 = vst [vmem:[#allocation11 + $0x38] sm:$0xff] %v1973
    %2006 = vst [vmem:[#allocation11 + $0x40] sm:$0xff] %v1974
    %2007 = vst [vmem:[#allocation11 + $0x48] sm:$0xff] %v1975
    %2008 = vst [vmem:[#allocation11 + $0x50] sm:$0xff] %v1976
    %2009 = vst [vmem:[#allocation11 + $0x58] sm:$0xff] %v1977
    %2010 = vst [vmem:[#allocation11 + $0x60] sm:$0xff] %v1978
    %2011 = vst [vmem:[#allocation11 + $0x68] sm:$0xff] %v1979
    %2012 = vst [vmem:[#allocation11 + $0x70] sm:$0xff] %v1980
    %2013 = vst [vmem:[#allocation11 + $0x78] sm:$0xff] %v1981
    %2014 = vst [vmem:[#allocation11 + $0x80] sm:$0xff] %v1982
    %2015 = vst [vmem:[#allocation11 + $0x88] sm:$0xff] %v1983
    %2016 = vst [vmem:[#allocation11 + $0x90] sm:$0xff] %v1984
    %2017 = vst [vmem:[#allocation11 + $0x98] sm:$0xff] %v1985
    %2018 = vst [vmem:[#allocation11 + $0xa0] sm:$0xff] %v1986
    %2019 = vst [vmem:[#allocation11 + $0xa8] sm:$0xff] %v1987
    %2020 = vst [vmem:[#allocation11 + $0xb0] sm:$0xff] %v1988
    %2021 = vst [vmem:[#allocation11 + $0xb8] sm:$0xff] %v1989
    %2022 = vst [vmem:[#allocation11 + $0xc0] sm:$0xff] %v1990
    %2023 = vst [vmem:[#allocation11 + $0xc8] sm:$0xff] %v1991
    %2024 = vst [vmem:[#allocation11 + $0xd0] sm:$0xff] %v1992
    %2025 = vst [vmem:[#allocation11 + $0xd8] sm:$0xff] %v1993
    %2026 = vst [vmem:[#allocation11 + $0xe0] sm:$0xff] %v1994
    %2027 = vst [vmem:[#allocation11 + $0xe8] sm:$0xff] %v1995
    %2028 = vst [vmem:[#allocation11 + $0xf0] sm:$0xff] %v1996
    %2029 = vst [vmem:[#allocation11 + $0xf8] sm:$0xff] %v1997
    // Predicated region
    $region54: #{tpu_custom_call.1} parent=1 // pred_check
      _
    $region55: #{tpu_custom_call.1} parent=1 // pred_check_branch
      %2031 = sbr.rel (0) target = $region57
    $region56: #{tpu_custom_call.1} parent=1 // pred_region
      %s2033 = ssub.s32 4096, 4096
      %2034 = vsyncadd [#allocation4], %s2033
      %s2035 = sshll.u32 [#allocation11], 4
      %s2036 = int_to_ptr.vmem [resolvable:$true] %s2035
      %2041 = dma.vmem_to_hbm [thread:$0]  %s2036, 4096, %s8, [#allocation4], 128, 128, 8
    $region57: #{tpu_custom_call.1} parent=1 // pred_fallthru
      _
    // Predicated region
    $region58: #{tpu_custom_call.1} parent=1 // pred_check
      _
    $region59: #{tpu_custom_call.1} parent=1 // pred_check_branch
      %2043 = sbr.rel (0) target = $region61
    $region60: #{tpu_custom_call.1} parent=1 // pred_region
      %2044 = dma.done [#allocation4], 4096
    $region61: #{tpu_custom_call.1} parent=1 // pred_fallthru
      _
    %2045 = vsyncpa [#allocation3], 1
    %2046 = vsyncpa [#allocation6], 1
    %2047 = vsyncpa [#allocation9], 1
    %2048 = vsyncpa [#allocation4], 1

</llo_original>
